<compile_context>
chip_gen: v5e
topology: v5e:2x2
jax: 0.10.0
libtpu: 0.0.40
codegen_flags: <defaults>
</compile_context>

<pallas_src>
import functools

import jax
import jax.numpy as jnp
from jax import lax
from jax.experimental import pallas as pl
from jax.experimental.pallas import tpu as pltpu

_EPS = 1e-5
_SUBLANE = 8  # f32 sublane tile; the channel axis is padded to a multiple of 8


# ----------------------------------------------------------------------------
# Fused kernel
# ----------------------------------------------------------------------------
def _resblock_kernel(xsrc_ref, w1_ref, g1_ref, b1_ref, w2_ref, g2_ref, b2_ref,
                     m1_ref, m2_ref, o_ref, *, pw, p_out, p_mid, src_off,
                     res_off, inv_count):
    """Fused ResidualBlock forward (channel-major, spatially flattened).

    xsrc_ref : (Cp, LX)      zero-framed, flattened, channel-major input
    w*_ref   : (9, Cp, Cp)   per-tap conv weights, tap t = dy*3 + dx
    g*/b*_ref: (Cp, 1)       BN gamma / beta
    m1_ref   : (1, p_mid)    validity mask for the conv1 ("interior") frame
    m2_ref   : (1, p_out)    validity mask for the conv2 / output frame
    o_ref    : (Cp, p_out)   flattened padded-NCHW output (lane-dense)
    """
    offs = tuple(dy * pw + dx for dy in range(3) for dx in range(3))
    m1 = m1_ref[...]
    m2 = m2_ref[...]

    def conv_bn(tap, w_ref, g_ref, b_ref, m):
        # 3x3 conv as 9 tap-accumulated MXU dots; each tap is a lane-offset
        # slice feeding the dot directly (no materialized im2col buffer).
        acc = jnp.dot(w_ref[0], tap(offs[0]), preferred_element_type=jnp.float32)
        for t in range(1, 9):
            acc = acc + jnp.dot(w_ref[t], tap(offs[t]),
                                preferred_element_type=jnp.float32)
        # Training-mode BatchNorm, masked one-pass statistics (f32).
        am = acc * m                                          # reused twice
        mean = jnp.sum(am, axis=1, keepdims=True) * inv_count
        ex2 = jnp.sum(am * acc, axis=1, keepdims=True) * inv_count
        var = ex2 - mean * mean
        scale = g_ref[...] * lax.rsqrt(var + _EPS)            # fold gamma
        shift = b_ref[...] - mean * scale
        return acc * scale + shift                            # one mul + add

    # conv1 + BN1 + ReLU.  (Conv bias omitted: a per-channel constant added
    # before training-mode BatchNorm is exactly cancelled by mean subtraction.)
    h = conv_bn(lambda o: xsrc_ref[:, src_off + o: src_off + o + p_mid],
                w1_ref, g1_ref, b1_ref, m1)
    # Masked h == zero-padded conv1 activation in the same flattened frame.
    h = (jnp.maximum(h, 0.0) * m1).astype(w2_ref.dtype)

    # conv2 + BN2 + identity residual + ReLU, entirely in VMEM.
    y = conv_bn(lambda o: h[:, o: o + p_out], w2_ref, g2_ref, b2_ref, m2)
    # Residual window starts at lane res_off = 128*k -> no cross-lane rotate.
    res = xsrc_ref[:, res_off: res_off + p_out].astype(jnp.float32)
    o_ref[...] = jnp.maximum(y + res, 0.0) * m2


# ----------------------------------------------------------------------------
# One-time packing + jitted per-call wrapper (NCHW in / NCHW out)
# ----------------------------------------------------------------------------
def _pack_weight_taps(w, c_pad, dtype):
    """OIHW (Cout, Cin, 3, 3) -> (9, Cp, Cp), tap t = dy*3 + dx."""
    cout, cin = w.shape[0], w.shape[1]
    wt = jnp.transpose(w, (2, 3, 0, 1)).reshape(9, cout, cin)   # (9, Co, Ci)
    wt = jnp.pad(wt, ((0, 0), (0, c_pad - cout), (0, c_pad - cin)))
    return wt.astype(dtype)


def make_residual_block(params, input_shape, compute_dtype=jnp.float32):
    """Builds a jitted forward; all static packing happens once, here."""
    N, C, H, W = input_shape
    cp = max(_SUBLANE, -(-C // _SUBLANE) * _SUBLANE)
    ph, pw = H + 2, W + 2
    blk = ph * pw
    p_valid = N * blk                     # real frame positions
    p_out = p_valid                       # output frame length
    p_mid = p_out + 2 * pw + 2            # conv1 ("interior") frame length
    # Left frame F chosen so the residual window (frame offset pw+1) starts on
    # a 128-lane boundary: F = 128*k - (pw+1), with F >= pw+1 so conv1 taps
    # never index below zero.
    k = -(-(2 * (pw + 1)) // 128)
    frame_l = 128 * k - (pw + 1)
    src_off = frame_l - (pw + 1)
    res_off = frame_l + pw + 1            # == 128*k
    lx_min = max(src_off + 2 * pw + 2 + p_mid, res_off + p_out)
    lx = -(-lx_min // 128) * 128          # whole-vreg-column xsrc width
    frame_r = lx - frame_l - p_valid
    inv_count = 1.0 / float(N * H * W)

    # --- static packing (hoisted off the per-call hot path) -----------------
    w1t = _pack_weight_taps(params["w1"].astype(jnp.float32), cp, compute_dtype)
    w2t = _pack_weight_taps(params["w2"].astype(jnp.float32), cp, compute_dtype)
    g1 = jnp.pad(params["g1"], (0, cp - C)).reshape(cp, 1).astype(jnp.float32)
    b1 = jnp.pad(params["be1"], (0, cp - C)).reshape(cp, 1).astype(jnp.float32)
    g2 = jnp.pad(params["g2"], (0, cp - C)).reshape(cp, 1).astype(jnp.float32)
    b2 = jnp.pad(params["be2"], (0, cp - C)).reshape(cp, 1).astype(jnp.float32)

    def _mask(length, interior):
        j = jnp.arange(length)
        r = j % blk
        yy, xx = r // pw, r % pw
        if interior:   # conv1 output: padded-frame coords (1..H, 1..W)
            ok = (j < p_valid) & (yy >= 1) & (yy <= H) & (xx >= 1) & (xx <= W)
        else:          # conv2/output frame: shifted coords (0..H-1, 0..W-1)
            ok = (j < p_valid) & (yy < H) & (xx < W)
        return ok.astype(jnp.float32).reshape(1, length)

    m1 = _mask(p_mid, True)
    m2 = _mask(p_out, False)

    kern = functools.partial(_resblock_kernel, pw=pw, p_out=p_out, p_mid=p_mid,
                             src_off=src_off, res_off=res_off,
                             inv_count=inv_count)
    vmem = pl.BlockSpec(memory_space=pltpu.MemorySpace.VMEM)
    call = pl.pallas_call(
        kern,
        out_shape=jax.ShapeDtypeStruct((cp, p_out), jnp.float32),
        in_specs=[vmem] * 9,
        out_specs=vmem,
        compiler_params=pltpu.CompilerParams(
            vmem_limit_bytes=16 * 1024 * 1024),
    )

    @jax.jit
    def apply(x_nchw):
        x = x_nchw.astype(jnp.float32)
        # Channel-major, zero-padded, flattened input with an F-lane left
        # frame and a right frame, so every 3x3 tap of both convs and the
        # residual are in-bounds static lane slices.
        xt = jnp.transpose(x, (1, 0, 2, 3))                            # (C,N,H,W)
        xp = jnp.pad(xt, ((0, cp - C), (0, 0), (1, 1), (1, 1)))        # (Cp,N,PH,PW)
        xsrc = jnp.pad(xp.reshape(cp, p_valid),
                       ((0, 0), (frame_l, frame_r))).astype(compute_dtype)
        out_flat = call(xsrc, w1t, g1, b1, w2t, g2, b2, m1, m2)
        out = out_flat.reshape(cp, N, ph, pw)[:C, :, :H, :W]           # (C,N,H,W)
        return jnp.transpose(out, (1, 0, 2, 3))                        # NCHW
    return apply


# ----------------------------------------------------------------------------
# Pure-JAX reference (training-mode BN, includes the conv bias)
# ----------------------------------------------------------------------------
def _ref_conv(x, w, b, stride):
    y = lax.conv_general_dilated(
        x, w, (stride, stride), ((1, 1), (1, 1)),
        dimension_numbers=("NCHW", "OIHW", "NCHW"))
    return y + b.reshape(1, -1, 1, 1)


def _ref_bn(x, g, be):
    mean = jnp.mean(x, axis=(0, 2, 3), keepdims=True)
    var = jnp.mean((x - mean) ** 2, axis=(0, 2, 3), keepdims=True)
    return (g.reshape(1, -1, 1, 1) * (x - mean) * lax.rsqrt(var + _EPS)
            + be.reshape(1, -1, 1, 1))


def _ref_forward(x, p):
    h = jax.nn.relu(_ref_bn(_ref_conv(x, p["w1"], p["b1"], 1), p["g1"], p["be1"]))
    h = _ref_bn(_ref_conv(h, p["w2"], p["b2"], 1), p["g2"], p["be2"])
    return jax.nn.relu(h + x)


# ----------------------------------------------------------------------------
# Main
# ----------------------------------------------------------------------------
if __name__ == "__main__":
    N, C, H, W = 2, 4, 16, 16   # inChannels == outChannels == 4, stride=1
    key = jax.random.PRNGKey(0)
    k_x, k_w1, k_b1, k_w2, k_b2 = jax.random.split(key, 5)

    # kaiming_normal_(mode='fan_out', nonlinearity='relu'): std = sqrt(2/(Cout*9))
    std = (2.0 / (C * 3 * 3)) ** 0.5
    # PyTorch default conv bias: U(-1/sqrt(fan_in*k*k), +)
    bound = 1.0 / (C * 3 * 3) ** 0.5

    params = {
        "w1": std * jax.random.normal(k_w1, (C, C, 3, 3), jnp.float32),
        "b1": jax.random.uniform(k_b1, (C,), jnp.float32, -bound, bound),
        "g1": jnp.ones((C,), jnp.float32),
        "be1": jnp.zeros((C,), jnp.float32),
        "w2": std * jax.random.normal(k_w2, (C, C, 3, 3), jnp.float32),
        "b2": jax.random.uniform(k_b2, (C,), jnp.float32, -bound, bound),
        "g2": jnp.ones((C,), jnp.float32),
        "be2": jnp.zeros((C,), jnp.float32),
    }

    x = jax.random.normal(k_x, (N, C, H, W), jnp.float32)

    forward = make_residual_block(params, (N, C, H, W),
                                  compute_dtype=jnp.float32)
    out = jax.block_until_ready(forward(x))
    ref = jax.block_until_ready(_ref_forward(x, params))

    assert out.shape == (N, C, H, W)
    err = float(jnp.max(jnp.abs(out - ref)))
    assert jnp.allclose(out, ref, rtol=1e-3, atol=1e-3), f"max abs err = {err}"

    print("KERNEL_OK")
</pallas_src>

<mosaic_0001>
module attributes {stable_mosaic.version = 11 : i64} {
  func.func @_resblock_kernel(%arg0: memref<8x896xf32, #tpu.memory_space<vmem>>, %arg1: memref<9x8x8xf32, #tpu.memory_space<vmem>>, %arg2: memref<8x1xf32, #tpu.memory_space<vmem>>, %arg3: memref<8x1xf32, #tpu.memory_space<vmem>>, %arg4: memref<9x8x8xf32, #tpu.memory_space<vmem>>, %arg5: memref<8x1xf32, #tpu.memory_space<vmem>>, %arg6: memref<8x1xf32, #tpu.memory_space<vmem>>, %arg7: memref<1x686xf32, #tpu.memory_space<vmem>>, %arg8: memref<1x648xf32, #tpu.memory_space<vmem>>, %arg9: memref<8x648xf32, #tpu.memory_space<vmem>>) attributes {dimension_semantics = [], scalar_prefetch = 0 : i64, scratch_operands = 0 : i64, tpu.core_type = #tpu.core_type<tc>} {
    %c0 = arith.constant 0 : index
    %c0_0 = arith.constant 0 : index
    %0 = vector.load %arg7[%c0, %c0_0] : memref<1x686xf32, #tpu.memory_space<vmem>>, vector<1x686xf32>
    %c0_1 = arith.constant 0 : index
    %c0_2 = arith.constant 0 : index
    %1 = vector.load %arg8[%c0_1, %c0_2] : memref<1x648xf32, #tpu.memory_space<vmem>>, vector<1x648xf32>
    %c0_3 = arith.constant 0 : index
    %c0_4 = arith.constant 0 : index
    %c0_5 = arith.constant 0 : index
    %2 = vector.load %arg1[%c0_3, %c0_4, %c0_5] : memref<9x8x8xf32, #tpu.memory_space<vmem>>, vector<1x8x8xf32>
    %3 = vector.shape_cast %2 : vector<1x8x8xf32> to vector<8x8xf32>
    %c0_6 = arith.constant 0 : index
    %c90 = arith.constant 90 : index
    %4 = vector.load %arg0[%c0_6, %c90] : memref<8x896xf32, #tpu.memory_space<vmem>>, vector<8x686xf32>
    %cst = arith.constant dense<0.000000e+00> : vector<8x686xf32>
    %5 = tpu.matmul %3, %4, %cst {dimension_numbers = #tpu.dot_dimension_numbers<[1], [0], [0], [1], [0, 0, 1, 1], [], []>} : vector<8x8xf32>, vector<8x686xf32>, vector<8x686xf32> -> vector<8x686xf32>
    %c1 = arith.constant 1 : index
    %c0_7 = arith.constant 0 : index
    %c0_8 = arith.constant 0 : index
    %6 = vector.load %arg1[%c1, %c0_7, %c0_8] : memref<9x8x8xf32, #tpu.memory_space<vmem>>, vector<1x8x8xf32>
    %7 = vector.shape_cast %6 : vector<1x8x8xf32> to vector<8x8xf32>
    %c0_9 = arith.constant 0 : index
    %c91 = arith.constant 91 : index
    %8 = vector.load %arg0[%c0_9, %c91] : memref<8x896xf32, #tpu.memory_space<vmem>>, vector<8x686xf32>
    %cst_10 = arith.constant dense<0.000000e+00> : vector<8x686xf32>
    %9 = tpu.matmul %7, %8, %cst_10 {dimension_numbers = #tpu.dot_dimension_numbers<[1], [0], [0], [1], [0, 0, 1, 1], [], []>} : vector<8x8xf32>, vector<8x686xf32>, vector<8x686xf32> -> vector<8x686xf32>
    %10 = arith.addf %5, %9 : vector<8x686xf32>
    %c2 = arith.constant 2 : index
    %c0_11 = arith.constant 0 : index
    %c0_12 = arith.constant 0 : index
    %11 = vector.load %arg1[%c2, %c0_11, %c0_12] : memref<9x8x8xf32, #tpu.memory_space<vmem>>, vector<1x8x8xf32>
    %12 = vector.shape_cast %11 : vector<1x8x8xf32> to vector<8x8xf32>
    %c0_13 = arith.constant 0 : index
    %c92 = arith.constant 92 : index
    %13 = vector.load %arg0[%c0_13, %c92] : memref<8x896xf32, #tpu.memory_space<vmem>>, vector<8x686xf32>
    %cst_14 = arith.constant dense<0.000000e+00> : vector<8x686xf32>
    %14 = tpu.matmul %12, %13, %cst_14 {dimension_numbers = #tpu.dot_dimension_numbers<[1], [0], [0], [1], [0, 0, 1, 1], [], []>} : vector<8x8xf32>, vector<8x686xf32>, vector<8x686xf32> -> vector<8x686xf32>
    %15 = arith.addf %10, %14 : vector<8x686xf32>
    %c3 = arith.constant 3 : index
    %c0_15 = arith.constant 0 : index
    %c0_16 = arith.constant 0 : index
    %16 = vector.load %arg1[%c3, %c0_15, %c0_16] : memref<9x8x8xf32, #tpu.memory_space<vmem>>, vector<1x8x8xf32>
    %17 = vector.shape_cast %16 : vector<1x8x8xf32> to vector<8x8xf32>
    %c0_17 = arith.constant 0 : index
    %c108 = arith.constant 108 : index
    %18 = vector.load %arg0[%c0_17, %c108] : memref<8x896xf32, #tpu.memory_space<vmem>>, vector<8x686xf32>
    %cst_18 = arith.constant dense<0.000000e+00> : vector<8x686xf32>
    %19 = tpu.matmul %17, %18, %cst_18 {dimension_numbers = #tpu.dot_dimension_numbers<[1], [0], [0], [1], [0, 0, 1, 1], [], []>} : vector<8x8xf32>, vector<8x686xf32>, vector<8x686xf32> -> vector<8x686xf32>
    %20 = arith.addf %15, %19 : vector<8x686xf32>
    %c4 = arith.constant 4 : index
    %c0_19 = arith.constant 0 : index
    %c0_20 = arith.constant 0 : index
    %21 = vector.load %arg1[%c4, %c0_19, %c0_20] : memref<9x8x8xf32, #tpu.memory_space<vmem>>, vector<1x8x8xf32>
    %22 = vector.shape_cast %21 : vector<1x8x8xf32> to vector<8x8xf32>
    %c0_21 = arith.constant 0 : index
    %c109 = arith.constant 109 : index
    %23 = vector.load %arg0[%c0_21, %c109] : memref<8x896xf32, #tpu.memory_space<vmem>>, vector<8x686xf32>
    %cst_22 = arith.constant dense<0.000000e+00> : vector<8x686xf32>
    %24 = tpu.matmul %22, %23, %cst_22 {dimension_numbers = #tpu.dot_dimension_numbers<[1], [0], [0], [1], [0, 0, 1, 1], [], []>} : vector<8x8xf32>, vector<8x686xf32>, vector<8x686xf32> -> vector<8x686xf32>
    %25 = arith.addf %20, %24 : vector<8x686xf32>
    %c5 = arith.constant 5 : index
    %c0_23 = arith.constant 0 : index
    %c0_24 = arith.constant 0 : index
    %26 = vector.load %arg1[%c5, %c0_23, %c0_24] : memref<9x8x8xf32, #tpu.memory_space<vmem>>, vector<1x8x8xf32>
    %27 = vector.shape_cast %26 : vector<1x8x8xf32> to vector<8x8xf32>
    %c0_25 = arith.constant 0 : index
    %c110 = arith.constant 110 : index
    %28 = vector.load %arg0[%c0_25, %c110] : memref<8x896xf32, #tpu.memory_space<vmem>>, vector<8x686xf32>
    %cst_26 = arith.constant dense<0.000000e+00> : vector<8x686xf32>
    %29 = tpu.matmul %27, %28, %cst_26 {dimension_numbers = #tpu.dot_dimension_numbers<[1], [0], [0], [1], [0, 0, 1, 1], [], []>} : vector<8x8xf32>, vector<8x686xf32>, vector<8x686xf32> -> vector<8x686xf32>
    %30 = arith.addf %25, %29 : vector<8x686xf32>
    %c6 = arith.constant 6 : index
    %c0_27 = arith.constant 0 : index
    %c0_28 = arith.constant 0 : index
    %31 = vector.load %arg1[%c6, %c0_27, %c0_28] : memref<9x8x8xf32, #tpu.memory_space<vmem>>, vector<1x8x8xf32>
    %32 = vector.shape_cast %31 : vector<1x8x8xf32> to vector<8x8xf32>
    %c0_29 = arith.constant 0 : index
    %c126 = arith.constant 126 : index
    %33 = vector.load %arg0[%c0_29, %c126] : memref<8x896xf32, #tpu.memory_space<vmem>>, vector<8x686xf32>
    %cst_30 = arith.constant dense<0.000000e+00> : vector<8x686xf32>
    %34 = tpu.matmul %32, %33, %cst_30 {dimension_numbers = #tpu.dot_dimension_numbers<[1], [0], [0], [1], [0, 0, 1, 1], [], []>} : vector<8x8xf32>, vector<8x686xf32>, vector<8x686xf32> -> vector<8x686xf32>
    %35 = arith.addf %30, %34 : vector<8x686xf32>
    %c7 = arith.constant 7 : index
    %c0_31 = arith.constant 0 : index
    %c0_32 = arith.constant 0 : index
    %36 = vector.load %arg1[%c7, %c0_31, %c0_32] : memref<9x8x8xf32, #tpu.memory_space<vmem>>, vector<1x8x8xf32>
    %37 = vector.shape_cast %36 : vector<1x8x8xf32> to vector<8x8xf32>
    %c0_33 = arith.constant 0 : index
    %c127 = arith.constant 127 : index
    %38 = vector.load %arg0[%c0_33, %c127] : memref<8x896xf32, #tpu.memory_space<vmem>>, vector<8x686xf32>
    %cst_34 = arith.constant dense<0.000000e+00> : vector<8x686xf32>
    %39 = tpu.matmul %37, %38, %cst_34 {dimension_numbers = #tpu.dot_dimension_numbers<[1], [0], [0], [1], [0, 0, 1, 1], [], []>} : vector<8x8xf32>, vector<8x686xf32>, vector<8x686xf32> -> vector<8x686xf32>
    %40 = arith.addf %35, %39 : vector<8x686xf32>
    %c8 = arith.constant 8 : index
    %c0_35 = arith.constant 0 : index
    %c0_36 = arith.constant 0 : index
    %41 = vector.load %arg1[%c8, %c0_35, %c0_36] : memref<9x8x8xf32, #tpu.memory_space<vmem>>, vector<1x8x8xf32>
    %42 = vector.shape_cast %41 : vector<1x8x8xf32> to vector<8x8xf32>
    %c0_37 = arith.constant 0 : index
    %c128 = arith.constant 128 : index
    %43 = vector.load %arg0[%c0_37, %c128] : memref<8x896xf32, #tpu.memory_space<vmem>>, vector<8x686xf32>
    %cst_38 = arith.constant dense<0.000000e+00> : vector<8x686xf32>
    %44 = tpu.matmul %42, %43, %cst_38 {dimension_numbers = #tpu.dot_dimension_numbers<[1], [0], [0], [1], [0, 0, 1, 1], [], []>} : vector<8x8xf32>, vector<8x686xf32>, vector<8x686xf32> -> vector<8x686xf32>
    %45 = arith.addf %40, %44 : vector<8x686xf32>
    %46 = vector.broadcast %0 : vector<1x686xf32> to vector<8x686xf32>
    %47 = arith.mulf %45, %46 : vector<8x686xf32>
    %cst_39 = arith.constant dense<0.000000e+00> : vector<8xf32>
    %48 = vector.multi_reduction <add>, %47, %cst_39 [1] : vector<8x686xf32> to vector<8xf32>
    %49 = vector.shape_cast %48 : vector<8xf32> to vector<8x1xf32>
    %cst_40 = arith.constant 0.001953125 : f32
    %50 = vector.broadcast %cst_40 : f32 to vector<8x1xf32>
    %51 = arith.mulf %49, %50 : vector<8x1xf32>
    %52 = arith.mulf %47, %45 : vector<8x686xf32>
    %cst_41 = arith.constant dense<0.000000e+00> : vector<8xf32>
    %53 = vector.multi_reduction <add>, %52, %cst_41 [1] : vector<8x686xf32> to vector<8xf32>
    %54 = vector.shape_cast %53 : vector<8xf32> to vector<8x1xf32>
    %cst_42 = arith.constant 0.001953125 : f32
    %55 = vector.broadcast %cst_42 : f32 to vector<8x1xf32>
    %56 = arith.mulf %54, %55 : vector<8x1xf32>
    %57 = arith.mulf %51, %51 : vector<8x1xf32>
    %58 = arith.subf %56, %57 : vector<8x1xf32>
    %c0_43 = arith.constant 0 : index
    %c0_44 = arith.constant 0 : index
    %59 = vector.load %arg2[%c0_43, %c0_44] : memref<8x1xf32, #tpu.memory_space<vmem>>, vector<8x1xf32>
    %cst_45 = arith.constant 9.99999974E-6 : f32
    %60 = vector.broadcast %cst_45 : f32 to vector<8x1xf32>
    %61 = arith.addf %58, %60 : vector<8x1xf32>
    %62 = math.rsqrt %61 : vector<8x1xf32>
    %63 = arith.mulf %59, %62 : vector<8x1xf32>
    %c0_46 = arith.constant 0 : index
    %c0_47 = arith.constant 0 : index
    %64 = vector.load %arg3[%c0_46, %c0_47] : memref<8x1xf32, #tpu.memory_space<vmem>>, vector<8x1xf32>
    %65 = arith.mulf %51, %63 : vector<8x1xf32>
    %66 = arith.subf %64, %65 : vector<8x1xf32>
    %67 = vector.broadcast %63 : vector<8x1xf32> to vector<8x686xf32>
    %68 = arith.mulf %45, %67 : vector<8x686xf32>
    %69 = vector.broadcast %66 : vector<8x1xf32> to vector<8x686xf32>
    %70 = arith.addf %68, %69 : vector<8x686xf32>
    %cst_48 = arith.constant 0.000000e+00 : f32
    %71 = vector.broadcast %cst_48 : f32 to vector<8x686xf32>
    %72 = arith.maximumf %70, %71 : vector<8x686xf32>
    %73 = vector.broadcast %0 : vector<1x686xf32> to vector<8x686xf32>
    %74 = arith.mulf %72, %73 : vector<8x686xf32>
    %c0_49 = arith.constant 0 : index
    %c0_50 = arith.constant 0 : index
    %c0_51 = arith.constant 0 : index
    %75 = vector.load %arg4[%c0_49, %c0_50, %c0_51] : memref<9x8x8xf32, #tpu.memory_space<vmem>>, vector<1x8x8xf32>
    %76 = vector.shape_cast %75 : vector<1x8x8xf32> to vector<8x8xf32>
    %77 = vector.extract_strided_slice %74 {offsets = [0, 0], sizes = [8, 648], strides = [1, 1]} : vector<8x686xf32> to vector<8x648xf32>
    %cst_52 = arith.constant dense<0.000000e+00> : vector<8x648xf32>
    %78 = tpu.matmul %76, %77, %cst_52 {dimension_numbers = #tpu.dot_dimension_numbers<[1], [0], [0], [1], [0, 0, 1, 1], [], []>} : vector<8x8xf32>, vector<8x648xf32>, vector<8x648xf32> -> vector<8x648xf32>
    %c1_53 = arith.constant 1 : index
    %c0_54 = arith.constant 0 : index
    %c0_55 = arith.constant 0 : index
    %79 = vector.load %arg4[%c1_53, %c0_54, %c0_55] : memref<9x8x8xf32, #tpu.memory_space<vmem>>, vector<1x8x8xf32>
    %80 = vector.shape_cast %79 : vector<1x8x8xf32> to vector<8x8xf32>
    %81 = vector.extract_strided_slice %74 {offsets = [0, 1], sizes = [8, 648], strides = [1, 1]} : vector<8x686xf32> to vector<8x648xf32>
    %cst_56 = arith.constant dense<0.000000e+00> : vector<8x648xf32>
    %82 = tpu.matmul %80, %81, %cst_56 {dimension_numbers = #tpu.dot_dimension_numbers<[1], [0], [0], [1], [0, 0, 1, 1], [], []>} : vector<8x8xf32>, vector<8x648xf32>, vector<8x648xf32> -> vector<8x648xf32>
    %83 = arith.addf %78, %82 : vector<8x648xf32>
    %c2_57 = arith.constant 2 : index
    %c0_58 = arith.constant 0 : index
    %c0_59 = arith.constant 0 : index
    %84 = vector.load %arg4[%c2_57, %c0_58, %c0_59] : memref<9x8x8xf32, #tpu.memory_space<vmem>>, vector<1x8x8xf32>
    %85 = vector.shape_cast %84 : vector<1x8x8xf32> to vector<8x8xf32>
    %86 = vector.extract_strided_slice %74 {offsets = [0, 2], sizes = [8, 648], strides = [1, 1]} : vector<8x686xf32> to vector<8x648xf32>
    %cst_60 = arith.constant dense<0.000000e+00> : vector<8x648xf32>
    %87 = tpu.matmul %85, %86, %cst_60 {dimension_numbers = #tpu.dot_dimension_numbers<[1], [0], [0], [1], [0, 0, 1, 1], [], []>} : vector<8x8xf32>, vector<8x648xf32>, vector<8x648xf32> -> vector<8x648xf32>
    %88 = arith.addf %83, %87 : vector<8x648xf32>
    %c3_61 = arith.constant 3 : index
    %c0_62 = arith.constant 0 : index
    %c0_63 = arith.constant 0 : index
    %89 = vector.load %arg4[%c3_61, %c0_62, %c0_63] : memref<9x8x8xf32, #tpu.memory_space<vmem>>, vector<1x8x8xf32>
    %90 = vector.shape_cast %89 : vector<1x8x8xf32> to vector<8x8xf32>
    %91 = vector.extract_strided_slice %74 {offsets = [0, 18], sizes = [8, 648], strides = [1, 1]} : vector<8x686xf32> to vector<8x648xf32>
    %cst_64 = arith.constant dense<0.000000e+00> : vector<8x648xf32>
    %92 = tpu.matmul %90, %91, %cst_64 {dimension_numbers = #tpu.dot_dimension_numbers<[1], [0], [0], [1], [0, 0, 1, 1], [], []>} : vector<8x8xf32>, vector<8x648xf32>, vector<8x648xf32> -> vector<8x648xf32>
    %93 = arith.addf %88, %92 : vector<8x648xf32>
    %c4_65 = arith.constant 4 : index
    %c0_66 = arith.constant 0 : index
    %c0_67 = arith.constant 0 : index
    %94 = vector.load %arg4[%c4_65, %c0_66, %c0_67] : memref<9x8x8xf32, #tpu.memory_space<vmem>>, vector<1x8x8xf32>
    %95 = vector.shape_cast %94 : vector<1x8x8xf32> to vector<8x8xf32>
    %96 = vector.extract_strided_slice %74 {offsets = [0, 19], sizes = [8, 648], strides = [1, 1]} : vector<8x686xf32> to vector<8x648xf32>
    %cst_68 = arith.constant dense<0.000000e+00> : vector<8x648xf32>
    %97 = tpu.matmul %95, %96, %cst_68 {dimension_numbers = #tpu.dot_dimension_numbers<[1], [0], [0], [1], [0, 0, 1, 1], [], []>} : vector<8x8xf32>, vector<8x648xf32>, vector<8x648xf32> -> vector<8x648xf32>
    %98 = arith.addf %93, %97 : vector<8x648xf32>
    %c5_69 = arith.constant 5 : index
    %c0_70 = arith.constant 0 : index
    %c0_71 = arith.constant 0 : index
    %99 = vector.load %arg4[%c5_69, %c0_70, %c0_71] : memref<9x8x8xf32, #tpu.memory_space<vmem>>, vector<1x8x8xf32>
    %100 = vector.shape_cast %99 : vector<1x8x8xf32> to vector<8x8xf32>
    %101 = vector.extract_strided_slice %74 {offsets = [0, 20], sizes = [8, 648], strides = [1, 1]} : vector<8x686xf32> to vector<8x648xf32>
    %cst_72 = arith.constant dense<0.000000e+00> : vector<8x648xf32>
    %102 = tpu.matmul %100, %101, %cst_72 {dimension_numbers = #tpu.dot_dimension_numbers<[1], [0], [0], [1], [0, 0, 1, 1], [], []>} : vector<8x8xf32>, vector<8x648xf32>, vector<8x648xf32> -> vector<8x648xf32>
    %103 = arith.addf %98, %102 : vector<8x648xf32>
    %c6_73 = arith.constant 6 : index
    %c0_74 = arith.constant 0 : index
    %c0_75 = arith.constant 0 : index
    %104 = vector.load %arg4[%c6_73, %c0_74, %c0_75] : memref<9x8x8xf32, #tpu.memory_space<vmem>>, vector<1x8x8xf32>
    %105 = vector.shape_cast %104 : vector<1x8x8xf32> to vector<8x8xf32>
    %106 = vector.extract_strided_slice %74 {offsets = [0, 36], sizes = [8, 648], strides = [1, 1]} : vector<8x686xf32> to vector<8x648xf32>
    %cst_76 = arith.constant dense<0.000000e+00> : vector<8x648xf32>
    %107 = tpu.matmul %105, %106, %cst_76 {dimension_numbers = #tpu.dot_dimension_numbers<[1], [0], [0], [1], [0, 0, 1, 1], [], []>} : vector<8x8xf32>, vector<8x648xf32>, vector<8x648xf32> -> vector<8x648xf32>
    %108 = arith.addf %103, %107 : vector<8x648xf32>
    %c7_77 = arith.constant 7 : index
    %c0_78 = arith.constant 0 : index
    %c0_79 = arith.constant 0 : index
    %109 = vector.load %arg4[%c7_77, %c0_78, %c0_79] : memref<9x8x8xf32, #tpu.memory_space<vmem>>, vector<1x8x8xf32>
    %110 = vector.shape_cast %109 : vector<1x8x8xf32> to vector<8x8xf32>
    %111 = vector.extract_strided_slice %74 {offsets = [0, 37], sizes = [8, 648], strides = [1, 1]} : vector<8x686xf32> to vector<8x648xf32>
    %cst_80 = arith.constant dense<0.000000e+00> : vector<8x648xf32>
    %112 = tpu.matmul %110, %111, %cst_80 {dimension_numbers = #tpu.dot_dimension_numbers<[1], [0], [0], [1], [0, 0, 1, 1], [], []>} : vector<8x8xf32>, vector<8x648xf32>, vector<8x648xf32> -> vector<8x648xf32>
    %113 = arith.addf %108, %112 : vector<8x648xf32>
    %c8_81 = arith.constant 8 : index
    %c0_82 = arith.constant 0 : index
    %c0_83 = arith.constant 0 : index
    %114 = vector.load %arg4[%c8_81, %c0_82, %c0_83] : memref<9x8x8xf32, #tpu.memory_space<vmem>>, vector<1x8x8xf32>
    %115 = vector.shape_cast %114 : vector<1x8x8xf32> to vector<8x8xf32>
    %116 = vector.extract_strided_slice %74 {offsets = [0, 38], sizes = [8, 648], strides = [1, 1]} : vector<8x686xf32> to vector<8x648xf32>
    %cst_84 = arith.constant dense<0.000000e+00> : vector<8x648xf32>
    %117 = tpu.matmul %115, %116, %cst_84 {dimension_numbers = #tpu.dot_dimension_numbers<[1], [0], [0], [1], [0, 0, 1, 1], [], []>} : vector<8x8xf32>, vector<8x648xf32>, vector<8x648xf32> -> vector<8x648xf32>
    %118 = arith.addf %113, %117 : vector<8x648xf32>
    %119 = vector.broadcast %1 : vector<1x648xf32> to vector<8x648xf32>
    %120 = arith.mulf %118, %119 : vector<8x648xf32>
    %cst_85 = arith.constant dense<0.000000e+00> : vector<8xf32>
    %121 = vector.multi_reduction <add>, %120, %cst_85 [1] : vector<8x648xf32> to vector<8xf32>
    %122 = vector.shape_cast %121 : vector<8xf32> to vector<8x1xf32>
    %cst_86 = arith.constant 0.001953125 : f32
    %123 = vector.broadcast %cst_86 : f32 to vector<8x1xf32>
    %124 = arith.mulf %122, %123 : vector<8x1xf32>
    %125 = arith.mulf %120, %118 : vector<8x648xf32>
    %cst_87 = arith.constant dense<0.000000e+00> : vector<8xf32>
    %126 = vector.multi_reduction <add>, %125, %cst_87 [1] : vector<8x648xf32> to vector<8xf32>
    %127 = vector.shape_cast %126 : vector<8xf32> to vector<8x1xf32>
    %cst_88 = arith.constant 0.001953125 : f32
    %128 = vector.broadcast %cst_88 : f32 to vector<8x1xf32>
    %129 = arith.mulf %127, %128 : vector<8x1xf32>
    %130 = arith.mulf %124, %124 : vector<8x1xf32>
    %131 = arith.subf %129, %130 : vector<8x1xf32>
    %c0_89 = arith.constant 0 : index
    %c0_90 = arith.constant 0 : index
    %132 = vector.load %arg5[%c0_89, %c0_90] : memref<8x1xf32, #tpu.memory_space<vmem>>, vector<8x1xf32>
    %cst_91 = arith.constant 9.99999974E-6 : f32
    %133 = vector.broadcast %cst_91 : f32 to vector<8x1xf32>
    %134 = arith.addf %131, %133 : vector<8x1xf32>
    %135 = math.rsqrt %134 : vector<8x1xf32>
    %136 = arith.mulf %132, %135 : vector<8x1xf32>
    %c0_92 = arith.constant 0 : index
    %c0_93 = arith.constant 0 : index
    %137 = vector.load %arg6[%c0_92, %c0_93] : memref<8x1xf32, #tpu.memory_space<vmem>>, vector<8x1xf32>
    %138 = arith.mulf %124, %136 : vector<8x1xf32>
    %139 = arith.subf %137, %138 : vector<8x1xf32>
    %140 = vector.broadcast %136 : vector<8x1xf32> to vector<8x648xf32>
    %141 = arith.mulf %118, %140 : vector<8x648xf32>
    %142 = vector.broadcast %139 : vector<8x1xf32> to vector<8x648xf32>
    %143 = arith.addf %141, %142 : vector<8x648xf32>
    %c0_94 = arith.constant 0 : index
    %c128_95 = arith.constant 128 : index
    %144 = vector.load %arg0[%c0_94, %c128_95] : memref<8x896xf32, #tpu.memory_space<vmem>>, vector<8x648xf32>
    %145 = arith.addf %143, %144 : vector<8x648xf32>
    %cst_96 = arith.constant 0.000000e+00 : f32
    %146 = vector.broadcast %cst_96 : f32 to vector<8x648xf32>
    %147 = arith.maximumf %145, %146 : vector<8x648xf32>
    %148 = vector.broadcast %1 : vector<1x648xf32> to vector<8x648xf32>
    %149 = arith.mulf %147, %148 : vector<8x648xf32>
    %c0_97 = arith.constant 0 : index
    %c0_98 = arith.constant 0 : index
    %150 = vector.load %arg9[%c0_97, %c0_98] : memref<8x648xf32, #tpu.memory_space<vmem>>, vector<8x648xf32>
    tpu.vector_store %arg9[%c0_97, %c0_98], %149 {strides = array<i32>} : memref<8x648xf32, #tpu.memory_space<vmem>>, vector<8x648xf32>,
    return
  }
}

</mosaic_0001>

<llo_original>
// kernel: apply.1
$region0: #{apply.1}
  #allocation0 [shape = 'u32[]', space=smem, size = 0x4, offset = 0x4, fixed_abs, tag = 'smem constant byte address 0x4 - core index']
  #allocation1 [shape = 'u32[72,128]{1,0:T(1,128)}', space=vmem, size = 0x9000, scoped, tag = 'internal scratch']
  %s0 = inlined_call_operand.vmem [shape: f32[8,896], index: 0, kind: input, shape index: {}]
  %s1 = inlined_call_operand.vmem [shape: f32[9,8,8], index: 1, kind: input, shape index: {}]
  %s2 = inlined_call_operand.vmem [shape: f32[8,1], index: 2, kind: input, shape index: {}, may-alias: {2,5}]
  %s3 = inlined_call_operand.vmem [shape: f32[8,1], index: 3, kind: input, shape index: {}, may-alias: {3,6}]
  %s4 = inlined_call_operand.vmem [shape: f32[9,8,8], index: 4, kind: input, shape index: {}]
  %s5 = inlined_call_operand.vmem [shape: f32[8,1], index: 5, kind: input, shape index: {}, may-alias: {2,5}]
  %s6 = inlined_call_operand.vmem [shape: f32[8,1], index: 6, kind: input, shape index: {}, may-alias: {3,6}]
  %s7 = inlined_call_operand.vmem [shape: f32[1,686], index: 7, kind: input, shape index: {}]
  %s8 = inlined_call_operand.vmem [shape: f32[1,648], index: 8, kind: input, shape index: {}]
  %s9 = inlined_call_operand.vmem [shape: f32[8,648], index: 9, kind: output, shape index: {}]
  %s10 = sld [smem:[#allocation0]]
  $region46: #{apply.1} parent=0
    _
  %s12 = ssub.s32 1, %s10
  %s13 = scalar_select 0, %s12, %s10
  // Predicated region
  $region2: #{apply.1} parent=0 // pred_check
    _
  $region3: #{apply.1} parent=0 // pred_check_branch
    %15 = sbr.rel (0) target = $region5
  $region4: #{apply.1} parent=0 // pred_region
    _
  $region5: #{apply.1} parent=0 // pred_fallthru
    _
  // Predicated region
  $region6: #{apply.1} parent=0 // pred_check
    _
  $region7: #{apply.1} parent=0 // pred_check_branch
    %17 = sbr.rel (0) target = $region9
  $region8: #{apply.1} parent=0 // pred_region
    _
  $region9: #{apply.1} parent=0 // pred_fallthru
    _
  // Predicated region
  $region10: #{apply.1} parent=0 // pred_check
    _
  $region11: #{apply.1} parent=0 // pred_check_branch
    %19 = sbr.rel (0) target = $region13
  $region12: #{apply.1} parent=0 // pred_region
    _
  $region13: #{apply.1} parent=0 // pred_fallthru
    _
  // Predicated region
  $region14: #{apply.1} parent=0 // pred_check
    _
  $region15: #{apply.1} parent=0 // pred_check_branch
    %21 = sbr.rel (0) target = $region17
  $region16: #{apply.1} parent=0 // pred_region
    _
  $region17: #{apply.1} parent=0 // pred_fallthru
    _
  // Predicated region
  $region18: #{apply.1} parent=0 // pred_check
    _
  $region19: #{apply.1} parent=0 // pred_check_branch
    %23 = sbr.rel (0) target = $region21
  $region20: #{apply.1} parent=0 // pred_region
    _
  $region21: #{apply.1} parent=0 // pred_fallthru
    _
  // Predicated region
  $region22: #{apply.1} parent=0 // pred_check
    _
  $region23: #{apply.1} parent=0 // pred_check_branch
    %25 = sbr.rel (0) target = $region25
  $region24: #{apply.1} parent=0 // pred_region
    _
  $region25: #{apply.1} parent=0 // pred_fallthru
    _
  // Predicated region
  $region26: #{apply.1} parent=0 // pred_check
    _
  $region27: #{apply.1} parent=0 // pred_check_branch
    %27 = sbr.rel (0) target = $region29
  $region28: #{apply.1} parent=0 // pred_region
    _
  $region29: #{apply.1} parent=0 // pred_fallthru
    _
  // Predicated region
  $region30: #{apply.1} parent=0 // pred_check
    _
  $region31: #{apply.1} parent=0 // pred_check_branch
    %29 = sbr.rel (0) target = $region33
  $region32: #{apply.1} parent=0 // pred_region
    _
  $region33: #{apply.1} parent=0 // pred_fallthru
    _
  // Predicated region
  $region34: #{apply.1} parent=0 // pred_check
    _
  $region35: #{apply.1} parent=0 // pred_check_branch
    %31 = sbr.rel (0) target = $region37
  $region36: #{apply.1} parent=0 // pred_region
    _
  $region37: #{apply.1} parent=0 // pred_fallthru
    _
  %v32 = vld [vmem:[%s7] sm:$0x3f]
  %v33 = vld [vmem:[%s8] sm:$0x3f]
  %v34 = vld [vmem:[%s1] sm:$0xff]
  %v35 = vld [vmem:[%s0] sm:$0xff]
  %v36 = vld [vmem:[%s0 + $0x8] sm:$0xff]
  %v37 = vld [vmem:[%s0 + $0x10] sm:$0xff]
  %v38 = vld [vmem:[%s0 + $0x18] sm:$0xff]
  %v39 = vld [vmem:[%s0 + $0x20] sm:$0xff]
  %v40 = vld [vmem:[%s0 + $0x28] sm:$0xff]
  %v41 = vld [vmem:[%s0 + $0x30] sm:$0xff]
  %s42 = scalar_lea.vmem %s1, 8
  %v43 = vld [vmem:[%s42] sm:$0xff]
  %51 = vrot.lane.b32.xlu0 %v35, 37
  %v52 = vpop.permute.xlu0 %51
  %53 = vrot.lane.b32.xlu0 %v36, 37
  %v54 = vpop.permute.xlu0 %53
  %55 = vrot.lane.b32.xlu0 %v37, 37
  %v56 = vpop.permute.xlu0 %55
  %57 = vrot.lane.b32.xlu0 %v38, 37
  %v58 = vpop.permute.xlu0 %57
  %59 = vrot.lane.b32.xlu0 %v39, 37
  %v60 = vpop.permute.xlu0 %59
  %61 = vrot.lane.b32.xlu0 %v40, 37
  %v62 = vpop.permute.xlu0 %61
  %63 = vrot.lane.b32.xlu0 %v41, 37
  %v64 = vpop.permute.xlu0 %63
  %vm65 = vcmask 302080
  %v66 = vsel %vm65, %v52, %v54
  %v67 = vsel %vm65, %v54, %v56
  %v68 = vsel %vm65, %v56, %v58
  %v69 = vsel %vm65, %v58, %v60
  %v70 = vsel %vm65, %v60, %v62
  %v71 = vsel %vm65, %v62, %v64
  %vm78 = vcmask 64512
  %v80 = vsel %vm78, %v43, 0
  %82 = vmatpush.msra.mxu0 0.0
  %83 = vmatpush.msra.mxu0 0.0
  %84 = vmatpush.msra.mxu0 0.0
  %85 = vmatpush.msra.mxu0 0.0
  %86 = vmatpush.msra.mxu0 0.0
  %87 = vmatpush.msra.mxu0 0.0
  %88 = vmatpush.msra.mxu0 0.0
  %89 = vmatpush.msra.mxu0 0.0
  %90 = vmatpush.msra.mxu0 0.0
  %91 = vmatpush.msra.mxu0 0.0
  %92 = vmatpush.msra.mxu0 0.0
  %93 = vmatpush.msra.mxu0 0.0
  %94 = vmatpush.msra.mxu0 0.0
  %95 = vmatpush.msra.mxu0 0.0
  %96 = vmatpush.msra.mxu0 0.0
  %97 = vmatpush.msra.mxu0 %v66
  %98 = vmatmul.f32.gmra.mxu0 %v80
  %v99 = vpop.f32.mrf.mxu0
  %v100 = vadd.f32 0.0, %v99
  %101 = vdwg.mxu0
  %102 = vmatpush.msra.mxu0 0.0
  %103 = vmatpush.msra.mxu0 0.0
  %104 = vmatpush.msra.mxu0 0.0
  %105 = vmatpush.msra.mxu0 0.0
  %106 = vmatpush.msra.mxu0 0.0
  %107 = vmatpush.msra.mxu0 0.0
  %108 = vmatpush.msra.mxu0 0.0
  %109 = vmatpush.msra.mxu0 0.0
  %110 = vmatpush.msra.mxu0 0.0
  %111 = vmatpush.msra.mxu0 0.0
  %112 = vmatpush.msra.mxu0 0.0
  %113 = vmatpush.msra.mxu0 0.0
  %114 = vmatpush.msra.mxu0 0.0
  %115 = vmatpush.msra.mxu0 0.0
  %116 = vmatpush.msra.mxu0 0.0
  %117 = vmatpush.msra.mxu0 %v67
  %118 = vmatmul.f32.gmra.mxu0 %v80
  %v119 = vpop.f32.mrf.mxu0
  %v120 = vadd.f32 0.0, %v119
  %121 = vdwg.mxu0
  %122 = vmatpush.msra.mxu0 0.0
  %123 = vmatpush.msra.mxu0 0.0
  %124 = vmatpush.msra.mxu0 0.0
  %125 = vmatpush.msra.mxu0 0.0
  %126 = vmatpush.msra.mxu0 0.0
  %127 = vmatpush.msra.mxu0 0.0
  %128 = vmatpush.msra.mxu0 0.0
  %129 = vmatpush.msra.mxu0 0.0
  %130 = vmatpush.msra.mxu0 0.0
  %131 = vmatpush.msra.mxu0 0.0
  %132 = vmatpush.msra.mxu0 0.0
  %133 = vmatpush.msra.mxu0 0.0
  %134 = vmatpush.msra.mxu0 0.0
  %135 = vmatpush.msra.mxu0 0.0
  %136 = vmatpush.msra.mxu0 0.0
  %137 = vmatpush.msra.mxu0 %v68
  %138 = vmatmul.f32.gmra.mxu0 %v80
  %v139 = vpop.f32.mrf.mxu0
  %v140 = vadd.f32 0.0, %v139
  %141 = vdwg.mxu0
  %142 = vmatpush.msra.mxu0 0.0
  %143 = vmatpush.msra.mxu0 0.0
  %144 = vmatpush.msra.mxu0 0.0
  %145 = vmatpush.msra.mxu0 0.0
  %146 = vmatpush.msra.mxu0 0.0
  %147 = vmatpush.msra.mxu0 0.0
  %148 = vmatpush.msra.mxu0 0.0
  %149 = vmatpush.msra.mxu0 0.0
  %150 = vmatpush.msra.mxu0 0.0
  %151 = vmatpush.msra.mxu0 0.0
  %152 = vmatpush.msra.mxu0 0.0
  %153 = vmatpush.msra.mxu0 0.0
  %154 = vmatpush.msra.mxu0 0.0
  %155 = vmatpush.msra.mxu0 0.0
  %156 = vmatpush.msra.mxu0 0.0
  %157 = vmatpush.msra.mxu0 %v69
  %158 = vmatmul.f32.gmra.mxu0 %v80
  %v159 = vpop.f32.mrf.mxu0
  %v160 = vadd.f32 0.0, %v159
  %161 = vdwg.mxu0
  %162 = vmatpush.msra.mxu0 0.0
  %163 = vmatpush.msra.mxu0 0.0
  %164 = vmatpush.msra.mxu0 0.0
  %165 = vmatpush.msra.mxu0 0.0
  %166 = vmatpush.msra.mxu0 0.0
  %167 = vmatpush.msra.mxu0 0.0
  %168 = vmatpush.msra.mxu0 0.0
  %169 = vmatpush.msra.mxu0 0.0
  %170 = vmatpush.msra.mxu0 0.0
  %171 = vmatpush.msra.mxu0 0.0
  %172 = vmatpush.msra.mxu0 0.0
  %173 = vmatpush.msra.mxu0 0.0
  %174 = vmatpush.msra.mxu0 0.0
  %175 = vmatpush.msra.mxu0 0.0
  %176 = vmatpush.msra.mxu0 0.0
  %177 = vmatpush.msra.mxu0 %v70
  %178 = vmatmul.f32.gmra.mxu0 %v80
  %v179 = vpop.f32.mrf.mxu0
  %v180 = vadd.f32 0.0, %v179
  %181 = vdwg.mxu0
  %182 = vmatpush.msra.mxu0 0.0
  %183 = vmatpush.msra.mxu0 0.0
  %184 = vmatpush.msra.mxu0 0.0
  %185 = vmatpush.msra.mxu0 0.0
  %186 = vmatpush.msra.mxu0 0.0
  %187 = vmatpush.msra.mxu0 0.0
  %188 = vmatpush.msra.mxu0 0.0
  %189 = vmatpush.msra.mxu0 0.0
  %190 = vmatpush.msra.mxu0 0.0
  %191 = vmatpush.msra.mxu0 0.0
  %192 = vmatpush.msra.mxu0 0.0
  %193 = vmatpush.msra.mxu0 0.0
  %194 = vmatpush.msra.mxu0 0.0
  %195 = vmatpush.msra.mxu0 0.0
  %196 = vmatpush.msra.mxu0 0.0
  %197 = vmatpush.msra.mxu0 %v71
  %198 = vmatmul.f32.gmra.mxu0 %v80
  %v199 = vpop.f32.mrf.mxu0
  %v200 = vadd.f32 0.0, %v199
  %201 = vdwg.mxu0
  %202 = vrot.lane.b32.xlu0 %v35, 38
  %v203 = vpop.permute.xlu0 %202
  %204 = vrot.lane.b32.xlu0 %v36, 38
  %v205 = vpop.permute.xlu0 %204
  %206 = vrot.lane.b32.xlu0 %v37, 38
  %v207 = vpop.permute.xlu0 %206
  %208 = vrot.lane.b32.xlu0 %v38, 38
  %v209 = vpop.permute.xlu0 %208
  %210 = vrot.lane.b32.xlu0 %v39, 38
  %v211 = vpop.permute.xlu0 %210
  %212 = vrot.lane.b32.xlu0 %v40, 38
  %v213 = vpop.permute.xlu0 %212
  %214 = vrot.lane.b32.xlu0 %v41, 38
  %v215 = vpop.permute.xlu0 %214
  %vm216 = vcmask 310272
  %v217 = vsel %vm216, %v203, %v205
  %v218 = vsel %vm216, %v205, %v207
  %v219 = vsel %vm216, %v207, %v209
  %v220 = vsel %vm216, %v209, %v211
  %v221 = vsel %vm216, %v211, %v213
  %v222 = vsel %vm216, %v213, %v215
  %v230 = vsel %vm78, %v34, 0
  %232 = vmatpush.msra.mxu0 0.0
  %233 = vmatpush.msra.mxu0 0.0
  %234 = vmatpush.msra.mxu0 0.0
  %235 = vmatpush.msra.mxu0 0.0
  %236 = vmatpush.msra.mxu0 0.0
  %237 = vmatpush.msra.mxu0 0.0
  %238 = vmatpush.msra.mxu0 0.0
  %239 = vmatpush.msra.mxu0 0.0
  %240 = vmatpush.msra.mxu0 0.0
  %241 = vmatpush.msra.mxu0 0.0
  %242 = vmatpush.msra.mxu0 0.0
  %243 = vmatpush.msra.mxu0 0.0
  %244 = vmatpush.msra.mxu0 0.0
  %245 = vmatpush.msra.mxu0 0.0
  %246 = vmatpush.msra.mxu0 0.0
  %247 = vmatpush.msra.mxu0 %v217
  %248 = vmatmul.f32.gmra.mxu0 %v230
  %v249 = vpop.f32.mrf.mxu0
  %v250 = vadd.f32 %v100, %v249
  %251 = vdwg.mxu0
  %252 = vmatpush.msra.mxu0 0.0
  %253 = vmatpush.msra.mxu0 0.0
  %254 = vmatpush.msra.mxu0 0.0
  %255 = vmatpush.msra.mxu0 0.0
  %256 = vmatpush.msra.mxu0 0.0
  %257 = vmatpush.msra.mxu0 0.0
  %258 = vmatpush.msra.mxu0 0.0
  %259 = vmatpush.msra.mxu0 0.0
  %260 = vmatpush.msra.mxu0 0.0
  %261 = vmatpush.msra.mxu0 0.0
  %262 = vmatpush.msra.mxu0 0.0
  %263 = vmatpush.msra.mxu0 0.0
  %264 = vmatpush.msra.mxu0 0.0
  %265 = vmatpush.msra.mxu0 0.0
  %266 = vmatpush.msra.mxu0 0.0
  %267 = vmatpush.msra.mxu0 %v218
  %268 = vmatmul.f32.gmra.mxu0 %v230
  %v269 = vpop.f32.mrf.mxu0
  %v270 = vadd.f32 %v120, %v269
  %271 = vdwg.mxu0
  %272 = vmatpush.msra.mxu0 0.0
  %273 = vmatpush.msra.mxu0 0.0
  %274 = vmatpush.msra.mxu0 0.0
  %275 = vmatpush.msra.mxu0 0.0
  %276 = vmatpush.msra.mxu0 0.0
  %277 = vmatpush.msra.mxu0 0.0
  %278 = vmatpush.msra.mxu0 0.0
  %279 = vmatpush.msra.mxu0 0.0
  %280 = vmatpush.msra.mxu0 0.0
  %281 = vmatpush.msra.mxu0 0.0
  %282 = vmatpush.msra.mxu0 0.0
  %283 = vmatpush.msra.mxu0 0.0
  %284 = vmatpush.msra.mxu0 0.0
  %285 = vmatpush.msra.mxu0 0.0
  %286 = vmatpush.msra.mxu0 0.0
  %287 = vmatpush.msra.mxu0 %v219
  %288 = vmatmul.f32.gmra.mxu0 %v230
  %v289 = vpop.f32.mrf.mxu0
  %v290 = vadd.f32 %v140, %v289
  %291 = vdwg.mxu0
  %292 = vmatpush.msra.mxu0 0.0
  %293 = vmatpush.msra.mxu0 0.0
  %294 = vmatpush.msra.mxu0 0.0
  %295 = vmatpush.msra.mxu0 0.0
  %296 = vmatpush.msra.mxu0 0.0
  %297 = vmatpush.msra.mxu0 0.0
  %298 = vmatpush.msra.mxu0 0.0
  %299 = vmatpush.msra.mxu0 0.0
  %300 = vmatpush.msra.mxu0 0.0
  %301 = vmatpush.msra.mxu0 0.0
  %302 = vmatpush.msra.mxu0 0.0
  %303 = vmatpush.msra.mxu0 0.0
  %304 = vmatpush.msra.mxu0 0.0
  %305 = vmatpush.msra.mxu0 0.0
  %306 = vmatpush.msra.mxu0 0.0
  %307 = vmatpush.msra.mxu0 %v220
  %308 = vmatmul.f32.gmra.mxu0 %v230
  %v309 = vpop.f32.mrf.mxu0
  %v310 = vadd.f32 %v160, %v309
  %311 = vdwg.mxu0
  %312 = vmatpush.msra.mxu0 0.0
  %313 = vmatpush.msra.mxu0 0.0
  %314 = vmatpush.msra.mxu0 0.0
  %315 = vmatpush.msra.mxu0 0.0
  %316 = vmatpush.msra.mxu0 0.0
  %317 = vmatpush.msra.mxu0 0.0
  %318 = vmatpush.msra.mxu0 0.0
  %319 = vmatpush.msra.mxu0 0.0
  %320 = vmatpush.msra.mxu0 0.0
  %321 = vmatpush.msra.mxu0 0.0
  %322 = vmatpush.msra.mxu0 0.0
  %323 = vmatpush.msra.mxu0 0.0
  %324 = vmatpush.msra.mxu0 0.0
  %325 = vmatpush.msra.mxu0 0.0
  %326 = vmatpush.msra.mxu0 0.0
  %327 = vmatpush.msra.mxu0 %v221
  %328 = vmatmul.f32.gmra.mxu0 %v230
  %v329 = vpop.f32.mrf.mxu0
  %v330 = vadd.f32 %v180, %v329
  %331 = vdwg.mxu0
  %332 = vmatpush.msra.mxu0 0.0
  %333 = vmatpush.msra.mxu0 0.0
  %334 = vmatpush.msra.mxu0 0.0
  %335 = vmatpush.msra.mxu0 0.0
  %336 = vmatpush.msra.mxu0 0.0
  %337 = vmatpush.msra.mxu0 0.0
  %338 = vmatpush.msra.mxu0 0.0
  %339 = vmatpush.msra.mxu0 0.0
  %340 = vmatpush.msra.mxu0 0.0
  %341 = vmatpush.msra.mxu0 0.0
  %342 = vmatpush.msra.mxu0 0.0
  %343 = vmatpush.msra.mxu0 0.0
  %344 = vmatpush.msra.mxu0 0.0
  %345 = vmatpush.msra.mxu0 0.0
  %346 = vmatpush.msra.mxu0 0.0
  %347 = vmatpush.msra.mxu0 %v222
  %348 = vmatmul.f32.gmra.mxu0 %v230
  %v349 = vpop.f32.mrf.mxu0
  %v350 = vadd.f32 %v200, %v349
  %351 = vdwg.mxu0
  %s352 = scalar_lea.vmem %s1, 16
  %v353 = vld [vmem:[%s352] sm:$0xff]
  %354 = vrot.lane.b32.xlu0 %v35, 36
  %v355 = vpop.permute.xlu0 %354
  %356 = vrot.lane.b32.xlu0 %v36, 36
  %v357 = vpop.permute.xlu0 %356
  %358 = vrot.lane.b32.xlu0 %v37, 36
  %v359 = vpop.permute.xlu0 %358
  %360 = vrot.lane.b32.xlu0 %v38, 36
  %v361 = vpop.permute.xlu0 %360
  %362 = vrot.lane.b32.xlu0 %v39, 36
  %v363 = vpop.permute.xlu0 %362
  %364 = vrot.lane.b32.xlu0 %v40, 36
  %v365 = vpop.permute.xlu0 %364
  %366 = vrot.lane.b32.xlu0 %v41, 36
  %v367 = vpop.permute.xlu0 %366
  %vm368 = vcmask 293888
  %v369 = vsel %vm368, %v355, %v357
  %v370 = vsel %vm368, %v357, %v359
  %v371 = vsel %vm368, %v359, %v361
  %v372 = vsel %vm368, %v361, %v363
  %v373 = vsel %vm368, %v363, %v365
  %v374 = vsel %vm368, %v365, %v367
  %v382 = vsel %vm78, %v353, 0
  %384 = vmatpush.msra.mxu0 0.0
  %385 = vmatpush.msra.mxu0 0.0
  %386 = vmatpush.msra.mxu0 0.0
  %387 = vmatpush.msra.mxu0 0.0
  %388 = vmatpush.msra.mxu0 0.0
  %389 = vmatpush.msra.mxu0 0.0
  %390 = vmatpush.msra.mxu0 0.0
  %391 = vmatpush.msra.mxu0 0.0
  %392 = vmatpush.msra.mxu0 0.0
  %393 = vmatpush.msra.mxu0 0.0
  %394 = vmatpush.msra.mxu0 0.0
  %395 = vmatpush.msra.mxu0 0.0
  %396 = vmatpush.msra.mxu0 0.0
  %397 = vmatpush.msra.mxu0 0.0
  %398 = vmatpush.msra.mxu0 0.0
  %399 = vmatpush.msra.mxu0 %v369
  %400 = vmatmul.f32.gmra.mxu0 %v382
  %v401 = vpop.f32.mrf.mxu0
  %v402 = vadd.f32 0.0, %v401
  %403 = vdwg.mxu0
  %404 = vmatpush.msra.mxu0 0.0
  %405 = vmatpush.msra.mxu0 0.0
  %406 = vmatpush.msra.mxu0 0.0
  %407 = vmatpush.msra.mxu0 0.0
  %408 = vmatpush.msra.mxu0 0.0
  %409 = vmatpush.msra.mxu0 0.0
  %410 = vmatpush.msra.mxu0 0.0
  %411 = vmatpush.msra.mxu0 0.0
  %412 = vmatpush.msra.mxu0 0.0
  %413 = vmatpush.msra.mxu0 0.0
  %414 = vmatpush.msra.mxu0 0.0
  %415 = vmatpush.msra.mxu0 0.0
  %416 = vmatpush.msra.mxu0 0.0
  %417 = vmatpush.msra.mxu0 0.0
  %418 = vmatpush.msra.mxu0 0.0
  %419 = vmatpush.msra.mxu0 %v370
  %420 = vmatmul.f32.gmra.mxu0 %v382
  %v421 = vpop.f32.mrf.mxu0
  %v422 = vadd.f32 0.0, %v421
  %423 = vdwg.mxu0
  %424 = vmatpush.msra.mxu0 0.0
  %425 = vmatpush.msra.mxu0 0.0
  %426 = vmatpush.msra.mxu0 0.0
  %427 = vmatpush.msra.mxu0 0.0
  %428 = vmatpush.msra.mxu0 0.0
  %429 = vmatpush.msra.mxu0 0.0
  %430 = vmatpush.msra.mxu0 0.0
  %431 = vmatpush.msra.mxu0 0.0
  %432 = vmatpush.msra.mxu0 0.0
  %433 = vmatpush.msra.mxu0 0.0
  %434 = vmatpush.msra.mxu0 0.0
  %435 = vmatpush.msra.mxu0 0.0
  %436 = vmatpush.msra.mxu0 0.0
  %437 = vmatpush.msra.mxu0 0.0
  %438 = vmatpush.msra.mxu0 0.0
  %439 = vmatpush.msra.mxu0 %v371
  %440 = vmatmul.f32.gmra.mxu0 %v382
  %v441 = vpop.f32.mrf.mxu0
  %v442 = vadd.f32 0.0, %v441
  %443 = vdwg.mxu0
  %444 = vmatpush.msra.mxu0 0.0
  %445 = vmatpush.msra.mxu0 0.0
  %446 = vmatpush.msra.mxu0 0.0
  %447 = vmatpush.msra.mxu0 0.0
  %448 = vmatpush.msra.mxu0 0.0
  %449 = vmatpush.msra.mxu0 0.0
  %450 = vmatpush.msra.mxu0 0.0
  %451 = vmatpush.msra.mxu0 0.0
  %452 = vmatpush.msra.mxu0 0.0
  %453 = vmatpush.msra.mxu0 0.0
  %454 = vmatpush.msra.mxu0 0.0
  %455 = vmatpush.msra.mxu0 0.0
  %456 = vmatpush.msra.mxu0 0.0
  %457 = vmatpush.msra.mxu0 0.0
  %458 = vmatpush.msra.mxu0 0.0
  %459 = vmatpush.msra.mxu0 %v372
  %460 = vmatmul.f32.gmra.mxu0 %v382
  %v461 = vpop.f32.mrf.mxu0
  %v462 = vadd.f32 0.0, %v461
  %463 = vdwg.mxu0
  %464 = vmatpush.msra.mxu0 0.0
  %465 = vmatpush.msra.mxu0 0.0
  %466 = vmatpush.msra.mxu0 0.0
  %467 = vmatpush.msra.mxu0 0.0
  %468 = vmatpush.msra.mxu0 0.0
  %469 = vmatpush.msra.mxu0 0.0
  %470 = vmatpush.msra.mxu0 0.0
  %471 = vmatpush.msra.mxu0 0.0
  %472 = vmatpush.msra.mxu0 0.0
  %473 = vmatpush.msra.mxu0 0.0
  %474 = vmatpush.msra.mxu0 0.0
  %475 = vmatpush.msra.mxu0 0.0
  %476 = vmatpush.msra.mxu0 0.0
  %477 = vmatpush.msra.mxu0 0.0
  %478 = vmatpush.msra.mxu0 0.0
  %479 = vmatpush.msra.mxu0 %v373
  %480 = vmatmul.f32.gmra.mxu0 %v382
  %v481 = vpop.f32.mrf.mxu0
  %v482 = vadd.f32 0.0, %v481
  %483 = vdwg.mxu0
  %484 = vmatpush.msra.mxu0 0.0
  %485 = vmatpush.msra.mxu0 0.0
  %486 = vmatpush.msra.mxu0 0.0
  %487 = vmatpush.msra.mxu0 0.0
  %488 = vmatpush.msra.mxu0 0.0
  %489 = vmatpush.msra.mxu0 0.0
  %490 = vmatpush.msra.mxu0 0.0
  %491 = vmatpush.msra.mxu0 0.0
  %492 = vmatpush.msra.mxu0 0.0
  %493 = vmatpush.msra.mxu0 0.0
  %494 = vmatpush.msra.mxu0 0.0
  %495 = vmatpush.msra.mxu0 0.0
  %496 = vmatpush.msra.mxu0 0.0
  %497 = vmatpush.msra.mxu0 0.0
  %498 = vmatpush.msra.mxu0 0.0
  %499 = vmatpush.msra.mxu0 %v374
  %500 = vmatmul.f32.gmra.mxu0 %v382
  %v501 = vpop.f32.mrf.mxu0
  %v502 = vadd.f32 0.0, %v501
  %503 = vdwg.mxu0
  %v504 = vadd.f32 %v250, %v402
  %v505 = vadd.f32 %v270, %v422
  %v506 = vadd.f32 %v290, %v442
  %v507 = vadd.f32 %v310, %v462
  %v508 = vadd.f32 %v330, %v482
  %v509 = vadd.f32 %v350, %v502
  %s510 = scalar_lea.vmem %s1, 24
  %v511 = vld [vmem:[%s510] sm:$0xff]
  %512 = vrot.lane.b32.xlu0 %v35, 20
  %v513 = vpop.permute.xlu0 %512
  %514 = vrot.lane.b32.xlu0 %v36, 20
  %v515 = vpop.permute.xlu0 %514
  %516 = vrot.lane.b32.xlu0 %v37, 20
  %v517 = vpop.permute.xlu0 %516
  %518 = vrot.lane.b32.xlu0 %v38, 20
  %v519 = vpop.permute.xlu0 %518
  %520 = vrot.lane.b32.xlu0 %v39, 20
  %v521 = vpop.permute.xlu0 %520
  %522 = vrot.lane.b32.xlu0 %v40, 20
  %v523 = vpop.permute.xlu0 %522
  %524 = vrot.lane.b32.xlu0 %v41, 20
  %v525 = vpop.permute.xlu0 %524
  %vm526 = vcmask 162816
  %v527 = vsel %vm526, %v513, %v515
  %v528 = vsel %vm526, %v515, %v517
  %v529 = vsel %vm526, %v517, %v519
  %v530 = vsel %vm526, %v519, %v521
  %v531 = vsel %vm526, %v521, %v523
  %v532 = vsel %vm526, %v523, %v525
  %v540 = vsel %vm78, %v511, 0
  %542 = vmatpush.msra.mxu0 0.0
  %543 = vmatpush.msra.mxu0 0.0
  %544 = vmatpush.msra.mxu0 0.0
  %545 = vmatpush.msra.mxu0 0.0
  %546 = vmatpush.msra.mxu0 0.0
  %547 = vmatpush.msra.mxu0 0.0
  %548 = vmatpush.msra.mxu0 0.0
  %549 = vmatpush.msra.mxu0 0.0
  %550 = vmatpush.msra.mxu0 0.0
  %551 = vmatpush.msra.mxu0 0.0
  %552 = vmatpush.msra.mxu0 0.0
  %553 = vmatpush.msra.mxu0 0.0
  %554 = vmatpush.msra.mxu0 0.0
  %555 = vmatpush.msra.mxu0 0.0
  %556 = vmatpush.msra.mxu0 0.0
  %557 = vmatpush.msra.mxu0 %v527
  %558 = vmatmul.f32.gmra.mxu0 %v540
  %v559 = vpop.f32.mrf.mxu0
  %v560 = vadd.f32 0.0, %v559
  %561 = vdwg.mxu0
  %562 = vmatpush.msra.mxu0 0.0
  %563 = vmatpush.msra.mxu0 0.0
  %564 = vmatpush.msra.mxu0 0.0
  %565 = vmatpush.msra.mxu0 0.0
  %566 = vmatpush.msra.mxu0 0.0
  %567 = vmatpush.msra.mxu0 0.0
  %568 = vmatpush.msra.mxu0 0.0
  %569 = vmatpush.msra.mxu0 0.0
  %570 = vmatpush.msra.mxu0 0.0
  %571 = vmatpush.msra.mxu0 0.0
  %572 = vmatpush.msra.mxu0 0.0
  %573 = vmatpush.msra.mxu0 0.0
  %574 = vmatpush.msra.mxu0 0.0
  %575 = vmatpush.msra.mxu0 0.0
  %576 = vmatpush.msra.mxu0 0.0
  %577 = vmatpush.msra.mxu0 %v528
  %578 = vmatmul.f32.gmra.mxu0 %v540
  %v579 = vpop.f32.mrf.mxu0
  %v580 = vadd.f32 0.0, %v579
  %581 = vdwg.mxu0
  %582 = vmatpush.msra.mxu0 0.0
  %583 = vmatpush.msra.mxu0 0.0
  %584 = vmatpush.msra.mxu0 0.0
  %585 = vmatpush.msra.mxu0 0.0
  %586 = vmatpush.msra.mxu0 0.0
  %587 = vmatpush.msra.mxu0 0.0
  %588 = vmatpush.msra.mxu0 0.0
  %589 = vmatpush.msra.mxu0 0.0
  %590 = vmatpush.msra.mxu0 0.0
  %591 = vmatpush.msra.mxu0 0.0
  %592 = vmatpush.msra.mxu0 0.0
  %593 = vmatpush.msra.mxu0 0.0
  %594 = vmatpush.msra.mxu0 0.0
  %595 = vmatpush.msra.mxu0 0.0
  %596 = vmatpush.msra.mxu0 0.0
  %597 = vmatpush.msra.mxu0 %v529
  %598 = vmatmul.f32.gmra.mxu0 %v540
  %v599 = vpop.f32.mrf.mxu0
  %v600 = vadd.f32 0.0, %v599
  %601 = vdwg.mxu0
  %602 = vmatpush.msra.mxu0 0.0
  %603 = vmatpush.msra.mxu0 0.0
  %604 = vmatpush.msra.mxu0 0.0
  %605 = vmatpush.msra.mxu0 0.0
  %606 = vmatpush.msra.mxu0 0.0
  %607 = vmatpush.msra.mxu0 0.0
  %608 = vmatpush.msra.mxu0 0.0
  %609 = vmatpush.msra.mxu0 0.0
  %610 = vmatpush.msra.mxu0 0.0
  %611 = vmatpush.msra.mxu0 0.0
  %612 = vmatpush.msra.mxu0 0.0
  %613 = vmatpush.msra.mxu0 0.0
  %614 = vmatpush.msra.mxu0 0.0
  %615 = vmatpush.msra.mxu0 0.0
  %616 = vmatpush.msra.mxu0 0.0
  %617 = vmatpush.msra.mxu0 %v530
  %618 = vmatmul.f32.gmra.mxu0 %v540
  %v619 = vpop.f32.mrf.mxu0
  %v620 = vadd.f32 0.0, %v619
  %621 = vdwg.mxu0
  %622 = vmatpush.msra.mxu0 0.0
  %623 = vmatpush.msra.mxu0 0.0
  %624 = vmatpush.msra.mxu0 0.0
  %625 = vmatpush.msra.mxu0 0.0
  %626 = vmatpush.msra.mxu0 0.0
  %627 = vmatpush.msra.mxu0 0.0
  %628 = vmatpush.msra.mxu0 0.0
  %629 = vmatpush.msra.mxu0 0.0
  %630 = vmatpush.msra.mxu0 0.0
  %631 = vmatpush.msra.mxu0 0.0
  %632 = vmatpush.msra.mxu0 0.0
  %633 = vmatpush.msra.mxu0 0.0
  %634 = vmatpush.msra.mxu0 0.0
  %635 = vmatpush.msra.mxu0 0.0
  %636 = vmatpush.msra.mxu0 0.0
  %637 = vmatpush.msra.mxu0 %v531
  %638 = vmatmul.f32.gmra.mxu0 %v540
  %v639 = vpop.f32.mrf.mxu0
  %v640 = vadd.f32 0.0, %v639
  %641 = vdwg.mxu0
  %642 = vmatpush.msra.mxu0 0.0
  %643 = vmatpush.msra.mxu0 0.0
  %644 = vmatpush.msra.mxu0 0.0
  %645 = vmatpush.msra.mxu0 0.0
  %646 = vmatpush.msra.mxu0 0.0
  %647 = vmatpush.msra.mxu0 0.0
  %648 = vmatpush.msra.mxu0 0.0
  %649 = vmatpush.msra.mxu0 0.0
  %650 = vmatpush.msra.mxu0 0.0
  %651 = vmatpush.msra.mxu0 0.0
  %652 = vmatpush.msra.mxu0 0.0
  %653 = vmatpush.msra.mxu0 0.0
  %654 = vmatpush.msra.mxu0 0.0
  %655 = vmatpush.msra.mxu0 0.0
  %656 = vmatpush.msra.mxu0 0.0
  %657 = vmatpush.msra.mxu0 %v532
  %658 = vmatmul.f32.gmra.mxu0 %v540
  %v659 = vpop.f32.mrf.mxu0
  %v660 = vadd.f32 0.0, %v659
  %661 = vdwg.mxu0
  %v662 = vadd.f32 %v504, %v560
  %v663 = vadd.f32 %v505, %v580
  %v664 = vadd.f32 %v506, %v600
  %v665 = vadd.f32 %v507, %v620
  %v666 = vadd.f32 %v508, %v640
  %v667 = vadd.f32 %v509, %v660
  %s668 = scalar_lea.vmem %s1, 32
  %v669 = vld [vmem:[%s668] sm:$0xff]
  %670 = vrot.lane.b32.xlu0 %v35, 19
  %v671 = vpop.permute.xlu0 %670
  %672 = vrot.lane.b32.xlu0 %v36, 19
  %v673 = vpop.permute.xlu0 %672
  %674 = vrot.lane.b32.xlu0 %v37, 19
  %v675 = vpop.permute.xlu0 %674
  %676 = vrot.lane.b32.xlu0 %v38, 19
  %v677 = vpop.permute.xlu0 %676
  %678 = vrot.lane.b32.xlu0 %v39, 19
  %v679 = vpop.permute.xlu0 %678
  %680 = vrot.lane.b32.xlu0 %v40, 19
  %v681 = vpop.permute.xlu0 %680
  %682 = vrot.lane.b32.xlu0 %v41, 19
  %v683 = vpop.permute.xlu0 %682
  %vm684 = vcmask 154624
  %v685 = vsel %vm684, %v671, %v673
  %v686 = vsel %vm684, %v673, %v675
  %v687 = vsel %vm684, %v675, %v677
  %v688 = vsel %vm684, %v677, %v679
  %v689 = vsel %vm684, %v679, %v681
  %v690 = vsel %vm684, %v681, %v683
  %v698 = vsel %vm78, %v669, 0
  %700 = vmatpush.msra.mxu0 0.0
  %701 = vmatpush.msra.mxu0 0.0
  %702 = vmatpush.msra.mxu0 0.0
  %703 = vmatpush.msra.mxu0 0.0
  %704 = vmatpush.msra.mxu0 0.0
  %705 = vmatpush.msra.mxu0 0.0
  %706 = vmatpush.msra.mxu0 0.0
  %707 = vmatpush.msra.mxu0 0.0
  %708 = vmatpush.msra.mxu0 0.0
  %709 = vmatpush.msra.mxu0 0.0
  %710 = vmatpush.msra.mxu0 0.0
  %711 = vmatpush.msra.mxu0 0.0
  %712 = vmatpush.msra.mxu0 0.0
  %713 = vmatpush.msra.mxu0 0.0
  %714 = vmatpush.msra.mxu0 0.0
  %715 = vmatpush.msra.mxu0 %v685
  %716 = vmatmul.f32.gmra.mxu0 %v698
  %v717 = vpop.f32.mrf.mxu0
  %v718 = vadd.f32 0.0, %v717
  %719 = vdwg.mxu0
  %720 = vmatpush.msra.mxu0 0.0
  %721 = vmatpush.msra.mxu0 0.0
  %722 = vmatpush.msra.mxu0 0.0
  %723 = vmatpush.msra.mxu0 0.0
  %724 = vmatpush.msra.mxu0 0.0
  %725 = vmatpush.msra.mxu0 0.0
  %726 = vmatpush.msra.mxu0 0.0
  %727 = vmatpush.msra.mxu0 0.0
  %728 = vmatpush.msra.mxu0 0.0
  %729 = vmatpush.msra.mxu0 0.0
  %730 = vmatpush.msra.mxu0 0.0
  %731 = vmatpush.msra.mxu0 0.0
  %732 = vmatpush.msra.mxu0 0.0
  %733 = vmatpush.msra.mxu0 0.0
  %734 = vmatpush.msra.mxu0 0.0
  %735 = vmatpush.msra.mxu0 %v686
  %736 = vmatmul.f32.gmra.mxu0 %v698
  %v737 = vpop.f32.mrf.mxu0
  %v738 = vadd.f32 0.0, %v737
  %739 = vdwg.mxu0
  %740 = vmatpush.msra.mxu0 0.0
  %741 = vmatpush.msra.mxu0 0.0
  %742 = vmatpush.msra.mxu0 0.0
  %743 = vmatpush.msra.mxu0 0.0
  %744 = vmatpush.msra.mxu0 0.0
  %745 = vmatpush.msra.mxu0 0.0
  %746 = vmatpush.msra.mxu0 0.0
  %747 = vmatpush.msra.mxu0 0.0
  %748 = vmatpush.msra.mxu0 0.0
  %749 = vmatpush.msra.mxu0 0.0
  %750 = vmatpush.msra.mxu0 0.0
  %751 = vmatpush.msra.mxu0 0.0
  %752 = vmatpush.msra.mxu0 0.0
  %753 = vmatpush.msra.mxu0 0.0
  %754 = vmatpush.msra.mxu0 0.0
  %755 = vmatpush.msra.mxu0 %v687
  %756 = vmatmul.f32.gmra.mxu0 %v698
  %v757 = vpop.f32.mrf.mxu0
  %v758 = vadd.f32 0.0, %v757
  %759 = vdwg.mxu0
  %760 = vmatpush.msra.mxu0 0.0
  %761 = vmatpush.msra.mxu0 0.0
  %762 = vmatpush.msra.mxu0 0.0
  %763 = vmatpush.msra.mxu0 0.0
  %764 = vmatpush.msra.mxu0 0.0
  %765 = vmatpush.msra.mxu0 0.0
  %766 = vmatpush.msra.mxu0 0.0
  %767 = vmatpush.msra.mxu0 0.0
  %768 = vmatpush.msra.mxu0 0.0
  %769 = vmatpush.msra.mxu0 0.0
  %770 = vmatpush.msra.mxu0 0.0
  %771 = vmatpush.msra.mxu0 0.0
  %772 = vmatpush.msra.mxu0 0.0
  %773 = vmatpush.msra.mxu0 0.0
  %774 = vmatpush.msra.mxu0 0.0
  %775 = vmatpush.msra.mxu0 %v688
  %776 = vmatmul.f32.gmra.mxu0 %v698
  %v777 = vpop.f32.mrf.mxu0
  %v778 = vadd.f32 0.0, %v777
  %779 = vdwg.mxu0
  %780 = vmatpush.msra.mxu0 0.0
  %781 = vmatpush.msra.mxu0 0.0
  %782 = vmatpush.msra.mxu0 0.0
  %783 = vmatpush.msra.mxu0 0.0
  %784 = vmatpush.msra.mxu0 0.0
  %785 = vmatpush.msra.mxu0 0.0
  %786 = vmatpush.msra.mxu0 0.0
  %787 = vmatpush.msra.mxu0 0.0
  %788 = vmatpush.msra.mxu0 0.0
  %789 = vmatpush.msra.mxu0 0.0
  %790 = vmatpush.msra.mxu0 0.0
  %791 = vmatpush.msra.mxu0 0.0
  %792 = vmatpush.msra.mxu0 0.0
  %793 = vmatpush.msra.mxu0 0.0
  %794 = vmatpush.msra.mxu0 0.0
  %795 = vmatpush.msra.mxu0 %v689
  %796 = vmatmul.f32.gmra.mxu0 %v698
  %v797 = vpop.f32.mrf.mxu0
  %v798 = vadd.f32 0.0, %v797
  %799 = vdwg.mxu0
  %800 = vmatpush.msra.mxu0 0.0
  %801 = vmatpush.msra.mxu0 0.0
  %802 = vmatpush.msra.mxu0 0.0
  %803 = vmatpush.msra.mxu0 0.0
  %804 = vmatpush.msra.mxu0 0.0
  %805 = vmatpush.msra.mxu0 0.0
  %806 = vmatpush.msra.mxu0 0.0
  %807 = vmatpush.msra.mxu0 0.0
  %808 = vmatpush.msra.mxu0 0.0
  %809 = vmatpush.msra.mxu0 0.0
  %810 = vmatpush.msra.mxu0 0.0
  %811 = vmatpush.msra.mxu0 0.0
  %812 = vmatpush.msra.mxu0 0.0
  %813 = vmatpush.msra.mxu0 0.0
  %814 = vmatpush.msra.mxu0 0.0
  %815 = vmatpush.msra.mxu0 %v690
  %816 = vmatmul.f32.gmra.mxu0 %v698
  %v817 = vpop.f32.mrf.mxu0
  %v818 = vadd.f32 0.0, %v817
  %819 = vdwg.mxu0
  %v820 = vadd.f32 %v662, %v718
  %v821 = vadd.f32 %v663, %v738
  %v822 = vadd.f32 %v664, %v758
  %v823 = vadd.f32 %v665, %v778
  %v824 = vadd.f32 %v666, %v798
  %v825 = vadd.f32 %v667, %v818
  %s826 = scalar_lea.vmem %s1, 40
  %v827 = vld [vmem:[%s826] sm:$0xff]
  %828 = vrot.lane.b32.xlu0 %v35, 18
  %v829 = vpop.permute.xlu0 %828
  %830 = vrot.lane.b32.xlu0 %v36, 18
  %v831 = vpop.permute.xlu0 %830
  %832 = vrot.lane.b32.xlu0 %v37, 18
  %v833 = vpop.permute.xlu0 %832
  %834 = vrot.lane.b32.xlu0 %v38, 18
  %v835 = vpop.permute.xlu0 %834
  %836 = vrot.lane.b32.xlu0 %v39, 18
  %v837 = vpop.permute.xlu0 %836
  %838 = vrot.lane.b32.xlu0 %v40, 18
  %v839 = vpop.permute.xlu0 %838
  %840 = vrot.lane.b32.xlu0 %v41, 18
  %v841 = vpop.permute.xlu0 %840
  %vm842 = vcmask 146432
  %v843 = vsel %vm842, %v829, %v831
  %v844 = vsel %vm842, %v831, %v833
  %v845 = vsel %vm842, %v833, %v835
  %v846 = vsel %vm842, %v835, %v837
  %v847 = vsel %vm842, %v837, %v839
  %v848 = vsel %vm842, %v839, %v841
  %v856 = vsel %vm78, %v827, 0
  %858 = vmatpush.msra.mxu0 0.0
  %859 = vmatpush.msra.mxu0 0.0
  %860 = vmatpush.msra.mxu0 0.0
  %861 = vmatpush.msra.mxu0 0.0
  %862 = vmatpush.msra.mxu0 0.0
  %863 = vmatpush.msra.mxu0 0.0
  %864 = vmatpush.msra.mxu0 0.0
  %865 = vmatpush.msra.mxu0 0.0
  %866 = vmatpush.msra.mxu0 0.0
  %867 = vmatpush.msra.mxu0 0.0
  %868 = vmatpush.msra.mxu0 0.0
  %869 = vmatpush.msra.mxu0 0.0
  %870 = vmatpush.msra.mxu0 0.0
  %871 = vmatpush.msra.mxu0 0.0
  %872 = vmatpush.msra.mxu0 0.0
  %873 = vmatpush.msra.mxu0 %v843
  %874 = vmatmul.f32.gmra.mxu0 %v856
  %v875 = vpop.f32.mrf.mxu0
  %v876 = vadd.f32 0.0, %v875
  %877 = vdwg.mxu0
  %878 = vmatpush.msra.mxu0 0.0
  %879 = vmatpush.msra.mxu0 0.0
  %880 = vmatpush.msra.mxu0 0.0
  %881 = vmatpush.msra.mxu0 0.0
  %882 = vmatpush.msra.mxu0 0.0
  %883 = vmatpush.msra.mxu0 0.0
  %884 = vmatpush.msra.mxu0 0.0
  %885 = vmatpush.msra.mxu0 0.0
  %886 = vmatpush.msra.mxu0 0.0
  %887 = vmatpush.msra.mxu0 0.0
  %888 = vmatpush.msra.mxu0 0.0
  %889 = vmatpush.msra.mxu0 0.0
  %890 = vmatpush.msra.mxu0 0.0
  %891 = vmatpush.msra.mxu0 0.0
  %892 = vmatpush.msra.mxu0 0.0
  %893 = vmatpush.msra.mxu0 %v844
  %894 = vmatmul.f32.gmra.mxu0 %v856
  %v895 = vpop.f32.mrf.mxu0
  %v896 = vadd.f32 0.0, %v895
  %897 = vdwg.mxu0
  %898 = vmatpush.msra.mxu0 0.0
  %899 = vmatpush.msra.mxu0 0.0
  %900 = vmatpush.msra.mxu0 0.0
  %901 = vmatpush.msra.mxu0 0.0
  %902 = vmatpush.msra.mxu0 0.0
  %903 = vmatpush.msra.mxu0 0.0
  %904 = vmatpush.msra.mxu0 0.0
  %905 = vmatpush.msra.mxu0 0.0
  %906 = vmatpush.msra.mxu0 0.0
  %907 = vmatpush.msra.mxu0 0.0
  %908 = vmatpush.msra.mxu0 0.0
  %909 = vmatpush.msra.mxu0 0.0
  %910 = vmatpush.msra.mxu0 0.0
  %911 = vmatpush.msra.mxu0 0.0
  %912 = vmatpush.msra.mxu0 0.0
  %913 = vmatpush.msra.mxu0 %v845
  %914 = vmatmul.f32.gmra.mxu0 %v856
  %v915 = vpop.f32.mrf.mxu0
  %v916 = vadd.f32 0.0, %v915
  %917 = vdwg.mxu0
  %918 = vmatpush.msra.mxu0 0.0
  %919 = vmatpush.msra.mxu0 0.0
  %920 = vmatpush.msra.mxu0 0.0
  %921 = vmatpush.msra.mxu0 0.0
  %922 = vmatpush.msra.mxu0 0.0
  %923 = vmatpush.msra.mxu0 0.0
  %924 = vmatpush.msra.mxu0 0.0
  %925 = vmatpush.msra.mxu0 0.0
  %926 = vmatpush.msra.mxu0 0.0
  %927 = vmatpush.msra.mxu0 0.0
  %928 = vmatpush.msra.mxu0 0.0
  %929 = vmatpush.msra.mxu0 0.0
  %930 = vmatpush.msra.mxu0 0.0
  %931 = vmatpush.msra.mxu0 0.0
  %932 = vmatpush.msra.mxu0 0.0
  %933 = vmatpush.msra.mxu0 %v846
  %934 = vmatmul.f32.gmra.mxu0 %v856
  %v935 = vpop.f32.mrf.mxu0
  %v936 = vadd.f32 0.0, %v935
  %937 = vdwg.mxu0
  %938 = vmatpush.msra.mxu0 0.0
  %939 = vmatpush.msra.mxu0 0.0
  %940 = vmatpush.msra.mxu0 0.0
  %941 = vmatpush.msra.mxu0 0.0
  %942 = vmatpush.msra.mxu0 0.0
  %943 = vmatpush.msra.mxu0 0.0
  %944 = vmatpush.msra.mxu0 0.0
  %945 = vmatpush.msra.mxu0 0.0
  %946 = vmatpush.msra.mxu0 0.0
  %947 = vmatpush.msra.mxu0 0.0
  %948 = vmatpush.msra.mxu0 0.0
  %949 = vmatpush.msra.mxu0 0.0
  %950 = vmatpush.msra.mxu0 0.0
  %951 = vmatpush.msra.mxu0 0.0
  %952 = vmatpush.msra.mxu0 0.0
  %953 = vmatpush.msra.mxu0 %v847
  %954 = vmatmul.f32.gmra.mxu0 %v856
  %v955 = vpop.f32.mrf.mxu0
  %v956 = vadd.f32 0.0, %v955
  %957 = vdwg.mxu0
  %958 = vmatpush.msra.mxu0 0.0
  %959 = vmatpush.msra.mxu0 0.0
  %960 = vmatpush.msra.mxu0 0.0
  %961 = vmatpush.msra.mxu0 0.0
  %962 = vmatpush.msra.mxu0 0.0
  %963 = vmatpush.msra.mxu0 0.0
  %964 = vmatpush.msra.mxu0 0.0
  %965 = vmatpush.msra.mxu0 0.0
  %966 = vmatpush.msra.mxu0 0.0
  %967 = vmatpush.msra.mxu0 0.0
  %968 = vmatpush.msra.mxu0 0.0
  %969 = vmatpush.msra.mxu0 0.0
  %970 = vmatpush.msra.mxu0 0.0
  %971 = vmatpush.msra.mxu0 0.0
  %972 = vmatpush.msra.mxu0 0.0
  %973 = vmatpush.msra.mxu0 %v848
  %974 = vmatmul.f32.gmra.mxu0 %v856
  %v975 = vpop.f32.mrf.mxu0
  %v976 = vadd.f32 0.0, %v975
  %977 = vdwg.mxu0
  %v978 = vadd.f32 %v820, %v876
  %v979 = vadd.f32 %v821, %v896
  %v980 = vadd.f32 %v822, %v916
  %v981 = vadd.f32 %v823, %v936
  %v982 = vadd.f32 %v824, %v956
  %v983 = vadd.f32 %v825, %v976
  %s984 = scalar_lea.vmem %s1, 48
  %v985 = vld [vmem:[%s984] sm:$0xff]
  %986 = vrot.lane.b32.xlu0 %v35, 2
  %v987 = vpop.permute.xlu0 %986
  %988 = vrot.lane.b32.xlu0 %v36, 2
  %v989 = vpop.permute.xlu0 %988
  %990 = vrot.lane.b32.xlu0 %v37, 2
  %v991 = vpop.permute.xlu0 %990
  %992 = vrot.lane.b32.xlu0 %v38, 2
  %v993 = vpop.permute.xlu0 %992
  %994 = vrot.lane.b32.xlu0 %v39, 2
  %v995 = vpop.permute.xlu0 %994
  %996 = vrot.lane.b32.xlu0 %v40, 2
  %v997 = vpop.permute.xlu0 %996
  %998 = vrot.lane.b32.xlu0 %v41, 2
  %v999 = vpop.permute.xlu0 %998
  %vm1000 = vcmask 15360
  %v1001 = vsel %vm1000, %v987, %v989
  %v1002 = vsel %vm1000, %v989, %v991
  %v1003 = vsel %vm1000, %v991, %v993
  %v1004 = vsel %vm1000, %v993, %v995
  %v1005 = vsel %vm1000, %v995, %v997
  %v1006 = vsel %vm1000, %v997, %v999
  %v1014 = vsel %vm78, %v985, 0
  %1016 = vmatpush.msra.mxu0 0.0
  %1017 = vmatpush.msra.mxu0 0.0
  %1018 = vmatpush.msra.mxu0 0.0
  %1019 = vmatpush.msra.mxu0 0.0
  %1020 = vmatpush.msra.mxu0 0.0
  %1021 = vmatpush.msra.mxu0 0.0
  %1022 = vmatpush.msra.mxu0 0.0
  %1023 = vmatpush.msra.mxu0 0.0
  %1024 = vmatpush.msra.mxu0 0.0
  %1025 = vmatpush.msra.mxu0 0.0
  %1026 = vmatpush.msra.mxu0 0.0
  %1027 = vmatpush.msra.mxu0 0.0
  %1028 = vmatpush.msra.mxu0 0.0
  %1029 = vmatpush.msra.mxu0 0.0
  %1030 = vmatpush.msra.mxu0 0.0
  %1031 = vmatpush.msra.mxu0 %v1001
  %1032 = vmatmul.f32.gmra.mxu0 %v1014
  %v1033 = vpop.f32.mrf.mxu0
  %v1034 = vadd.f32 0.0, %v1033
  %1035 = vdwg.mxu0
  %1036 = vmatpush.msra.mxu0 0.0
  %1037 = vmatpush.msra.mxu0 0.0
  %1038 = vmatpush.msra.mxu0 0.0
  %1039 = vmatpush.msra.mxu0 0.0
  %1040 = vmatpush.msra.mxu0 0.0
  %1041 = vmatpush.msra.mxu0 0.0
  %1042 = vmatpush.msra.mxu0 0.0
  %1043 = vmatpush.msra.mxu0 0.0
  %1044 = vmatpush.msra.mxu0 0.0
  %1045 = vmatpush.msra.mxu0 0.0
  %1046 = vmatpush.msra.mxu0 0.0
  %1047 = vmatpush.msra.mxu0 0.0
  %1048 = vmatpush.msra.mxu0 0.0
  %1049 = vmatpush.msra.mxu0 0.0
  %1050 = vmatpush.msra.mxu0 0.0
  %1051 = vmatpush.msra.mxu0 %v1002
  %1052 = vmatmul.f32.gmra.mxu0 %v1014
  %v1053 = vpop.f32.mrf.mxu0
  %v1054 = vadd.f32 0.0, %v1053
  %1055 = vdwg.mxu0
  %1056 = vmatpush.msra.mxu0 0.0
  %1057 = vmatpush.msra.mxu0 0.0
  %1058 = vmatpush.msra.mxu0 0.0
  %1059 = vmatpush.msra.mxu0 0.0
  %1060 = vmatpush.msra.mxu0 0.0
  %1061 = vmatpush.msra.mxu0 0.0
  %1062 = vmatpush.msra.mxu0 0.0
  %1063 = vmatpush.msra.mxu0 0.0
  %1064 = vmatpush.msra.mxu0 0.0
  %1065 = vmatpush.msra.mxu0 0.0
  %1066 = vmatpush.msra.mxu0 0.0
  %1067 = vmatpush.msra.mxu0 0.0
  %1068 = vmatpush.msra.mxu0 0.0
  %1069 = vmatpush.msra.mxu0 0.0
  %1070 = vmatpush.msra.mxu0 0.0
  %1071 = vmatpush.msra.mxu0 %v1003
  %1072 = vmatmul.f32.gmra.mxu0 %v1014
  %v1073 = vpop.f32.mrf.mxu0
  %v1074 = vadd.f32 0.0, %v1073
  %1075 = vdwg.mxu0
  %1076 = vmatpush.msra.mxu0 0.0
  %1077 = vmatpush.msra.mxu0 0.0
  %1078 = vmatpush.msra.mxu0 0.0
  %1079 = vmatpush.msra.mxu0 0.0
  %1080 = vmatpush.msra.mxu0 0.0
  %1081 = vmatpush.msra.mxu0 0.0
  %1082 = vmatpush.msra.mxu0 0.0
  %1083 = vmatpush.msra.mxu0 0.0
  %1084 = vmatpush.msra.mxu0 0.0
  %1085 = vmatpush.msra.mxu0 0.0
  %1086 = vmatpush.msra.mxu0 0.0
  %1087 = vmatpush.msra.mxu0 0.0
  %1088 = vmatpush.msra.mxu0 0.0
  %1089 = vmatpush.msra.mxu0 0.0
  %1090 = vmatpush.msra.mxu0 0.0
  %1091 = vmatpush.msra.mxu0 %v1004
  %1092 = vmatmul.f32.gmra.mxu0 %v1014
  %v1093 = vpop.f32.mrf.mxu0
  %v1094 = vadd.f32 0.0, %v1093
  %1095 = vdwg.mxu0
  %1096 = vmatpush.msra.mxu0 0.0
  %1097 = vmatpush.msra.mxu0 0.0
  %1098 = vmatpush.msra.mxu0 0.0
  %1099 = vmatpush.msra.mxu0 0.0
  %1100 = vmatpush.msra.mxu0 0.0
  %1101 = vmatpush.msra.mxu0 0.0
  %1102 = vmatpush.msra.mxu0 0.0
  %1103 = vmatpush.msra.mxu0 0.0
  %1104 = vmatpush.msra.mxu0 0.0
  %1105 = vmatpush.msra.mxu0 0.0
  %1106 = vmatpush.msra.mxu0 0.0
  %1107 = vmatpush.msra.mxu0 0.0
  %1108 = vmatpush.msra.mxu0 0.0
  %1109 = vmatpush.msra.mxu0 0.0
  %1110 = vmatpush.msra.mxu0 0.0
  %1111 = vmatpush.msra.mxu0 %v1005
  %1112 = vmatmul.f32.gmra.mxu0 %v1014
  %v1113 = vpop.f32.mrf.mxu0
  %v1114 = vadd.f32 0.0, %v1113
  %1115 = vdwg.mxu0
  %1116 = vmatpush.msra.mxu0 0.0
  %1117 = vmatpush.msra.mxu0 0.0
  %1118 = vmatpush.msra.mxu0 0.0
  %1119 = vmatpush.msra.mxu0 0.0
  %1120 = vmatpush.msra.mxu0 0.0
  %1121 = vmatpush.msra.mxu0 0.0
  %1122 = vmatpush.msra.mxu0 0.0
  %1123 = vmatpush.msra.mxu0 0.0
  %1124 = vmatpush.msra.mxu0 0.0
  %1125 = vmatpush.msra.mxu0 0.0
  %1126 = vmatpush.msra.mxu0 0.0
  %1127 = vmatpush.msra.mxu0 0.0
  %1128 = vmatpush.msra.mxu0 0.0
  %1129 = vmatpush.msra.mxu0 0.0
  %1130 = vmatpush.msra.mxu0 0.0
  %1131 = vmatpush.msra.mxu0 %v1006
  %1132 = vmatmul.f32.gmra.mxu0 %v1014
  %v1133 = vpop.f32.mrf.mxu0
  %v1134 = vadd.f32 0.0, %v1133
  %1135 = vdwg.mxu0
  %v1136 = vadd.f32 %v978, %v1034
  %v1137 = vadd.f32 %v979, %v1054
  %v1138 = vadd.f32 %v980, %v1074
  %v1139 = vadd.f32 %v981, %v1094
  %v1140 = vadd.f32 %v982, %v1114
  %v1141 = vadd.f32 %v983, %v1134
  %s1142 = scalar_lea.vmem %s1, 56
  %v1143 = vld [vmem:[%s1142] sm:$0xff]
  %1144 = vrot.lane.b32.xlu0 %v35, 1
  %v1145 = vpop.permute.xlu0 %1144
  %1146 = vrot.lane.b32.xlu0 %v36, 1
  %v1147 = vpop.permute.xlu0 %1146
  %1148 = vrot.lane.b32.xlu0 %v37, 1
  %v1149 = vpop.permute.xlu0 %1148
  %1150 = vrot.lane.b32.xlu0 %v38, 1
  %v1151 = vpop.permute.xlu0 %1150
  %1152 = vrot.lane.b32.xlu0 %v39, 1
  %v1153 = vpop.permute.xlu0 %1152
  %1154 = vrot.lane.b32.xlu0 %v40, 1
  %v1155 = vpop.permute.xlu0 %1154
  %1156 = vrot.lane.b32.xlu0 %v41, 1
  %v1157 = vpop.permute.xlu0 %1156
  %vm1158 = vcmask 7168
  %v1159 = vsel %vm1158, %v1145, %v1147
  %v1160 = vsel %vm1158, %v1147, %v1149
  %v1161 = vsel %vm1158, %v1149, %v1151
  %v1162 = vsel %vm1158, %v1151, %v1153
  %v1163 = vsel %vm1158, %v1153, %v1155
  %v1164 = vsel %vm1158, %v1155, %v1157
  %v1172 = vsel %vm78, %v1143, 0
  %1174 = vmatpush.msra.mxu0 0.0
  %1175 = vmatpush.msra.mxu0 0.0
  %1176 = vmatpush.msra.mxu0 0.0
  %1177 = vmatpush.msra.mxu0 0.0
  %1178 = vmatpush.msra.mxu0 0.0
  %1179 = vmatpush.msra.mxu0 0.0
  %1180 = vmatpush.msra.mxu0 0.0
  %1181 = vmatpush.msra.mxu0 0.0
  %1182 = vmatpush.msra.mxu0 0.0
  %1183 = vmatpush.msra.mxu0 0.0
  %1184 = vmatpush.msra.mxu0 0.0
  %1185 = vmatpush.msra.mxu0 0.0
  %1186 = vmatpush.msra.mxu0 0.0
  %1187 = vmatpush.msra.mxu0 0.0
  %1188 = vmatpush.msra.mxu0 0.0
  %1189 = vmatpush.msra.mxu0 %v1159
  %1190 = vmatmul.f32.gmra.mxu0 %v1172
  %v1191 = vpop.f32.mrf.mxu0
  %v1192 = vadd.f32 0.0, %v1191
  %1193 = vdwg.mxu0
  %1194 = vmatpush.msra.mxu0 0.0
  %1195 = vmatpush.msra.mxu0 0.0
  %1196 = vmatpush.msra.mxu0 0.0
  %1197 = vmatpush.msra.mxu0 0.0
  %1198 = vmatpush.msra.mxu0 0.0
  %1199 = vmatpush.msra.mxu0 0.0
  %1200 = vmatpush.msra.mxu0 0.0
  %1201 = vmatpush.msra.mxu0 0.0
  %1202 = vmatpush.msra.mxu0 0.0
  %1203 = vmatpush.msra.mxu0 0.0
  %1204 = vmatpush.msra.mxu0 0.0
  %1205 = vmatpush.msra.mxu0 0.0
  %1206 = vmatpush.msra.mxu0 0.0
  %1207 = vmatpush.msra.mxu0 0.0
  %1208 = vmatpush.msra.mxu0 0.0
  %1209 = vmatpush.msra.mxu0 %v1160
  %1210 = vmatmul.f32.gmra.mxu0 %v1172
  %v1211 = vpop.f32.mrf.mxu0
  %v1212 = vadd.f32 0.0, %v1211
  %1213 = vdwg.mxu0
  %1214 = vmatpush.msra.mxu0 0.0
  %1215 = vmatpush.msra.mxu0 0.0
  %1216 = vmatpush.msra.mxu0 0.0
  %1217 = vmatpush.msra.mxu0 0.0
  %1218 = vmatpush.msra.mxu0 0.0
  %1219 = vmatpush.msra.mxu0 0.0
  %1220 = vmatpush.msra.mxu0 0.0
  %1221 = vmatpush.msra.mxu0 0.0
  %1222 = vmatpush.msra.mxu0 0.0
  %1223 = vmatpush.msra.mxu0 0.0
  %1224 = vmatpush.msra.mxu0 0.0
  %1225 = vmatpush.msra.mxu0 0.0
  %1226 = vmatpush.msra.mxu0 0.0
  %1227 = vmatpush.msra.mxu0 0.0
  %1228 = vmatpush.msra.mxu0 0.0
  %1229 = vmatpush.msra.mxu0 %v1161
  %1230 = vmatmul.f32.gmra.mxu0 %v1172
  %v1231 = vpop.f32.mrf.mxu0
  %v1232 = vadd.f32 0.0, %v1231
  %1233 = vdwg.mxu0
  %1234 = vmatpush.msra.mxu0 0.0
  %1235 = vmatpush.msra.mxu0 0.0
  %1236 = vmatpush.msra.mxu0 0.0
  %1237 = vmatpush.msra.mxu0 0.0
  %1238 = vmatpush.msra.mxu0 0.0
  %1239 = vmatpush.msra.mxu0 0.0
  %1240 = vmatpush.msra.mxu0 0.0
  %1241 = vmatpush.msra.mxu0 0.0
  %1242 = vmatpush.msra.mxu0 0.0
  %1243 = vmatpush.msra.mxu0 0.0
  %1244 = vmatpush.msra.mxu0 0.0
  %1245 = vmatpush.msra.mxu0 0.0
  %1246 = vmatpush.msra.mxu0 0.0
  %1247 = vmatpush.msra.mxu0 0.0
  %1248 = vmatpush.msra.mxu0 0.0
  %1249 = vmatpush.msra.mxu0 %v1162
  %1250 = vmatmul.f32.gmra.mxu0 %v1172
  %v1251 = vpop.f32.mrf.mxu0
  %v1252 = vadd.f32 0.0, %v1251
  %1253 = vdwg.mxu0
  %1254 = vmatpush.msra.mxu0 0.0
  %1255 = vmatpush.msra.mxu0 0.0
  %1256 = vmatpush.msra.mxu0 0.0
  %1257 = vmatpush.msra.mxu0 0.0
  %1258 = vmatpush.msra.mxu0 0.0
  %1259 = vmatpush.msra.mxu0 0.0
  %1260 = vmatpush.msra.mxu0 0.0
  %1261 = vmatpush.msra.mxu0 0.0
  %1262 = vmatpush.msra.mxu0 0.0
  %1263 = vmatpush.msra.mxu0 0.0
  %1264 = vmatpush.msra.mxu0 0.0
  %1265 = vmatpush.msra.mxu0 0.0
  %1266 = vmatpush.msra.mxu0 0.0
  %1267 = vmatpush.msra.mxu0 0.0
  %1268 = vmatpush.msra.mxu0 0.0
  %1269 = vmatpush.msra.mxu0 %v1163
  %1270 = vmatmul.f32.gmra.mxu0 %v1172
  %v1271 = vpop.f32.mrf.mxu0
  %v1272 = vadd.f32 0.0, %v1271
  %1273 = vdwg.mxu0
  %1274 = vmatpush.msra.mxu0 0.0
  %1275 = vmatpush.msra.mxu0 0.0
  %1276 = vmatpush.msra.mxu0 0.0
  %1277 = vmatpush.msra.mxu0 0.0
  %1278 = vmatpush.msra.mxu0 0.0
  %1279 = vmatpush.msra.mxu0 0.0
  %1280 = vmatpush.msra.mxu0 0.0
  %1281 = vmatpush.msra.mxu0 0.0
  %1282 = vmatpush.msra.mxu0 0.0
  %1283 = vmatpush.msra.mxu0 0.0
  %1284 = vmatpush.msra.mxu0 0.0
  %1285 = vmatpush.msra.mxu0 0.0
  %1286 = vmatpush.msra.mxu0 0.0
  %1287 = vmatpush.msra.mxu0 0.0
  %1288 = vmatpush.msra.mxu0 0.0
  %1289 = vmatpush.msra.mxu0 %v1164
  %1290 = vmatmul.f32.gmra.mxu0 %v1172
  %v1291 = vpop.f32.mrf.mxu0
  %v1292 = vadd.f32 0.0, %v1291
  %1293 = vdwg.mxu0
  %v1294 = vadd.f32 %v1136, %v1192
  %v1295 = vadd.f32 %v1137, %v1212
  %v1296 = vadd.f32 %v1138, %v1232
  %v1297 = vadd.f32 %v1139, %v1252
  %v1298 = vadd.f32 %v1140, %v1272
  %v1299 = vadd.f32 %v1141, %v1292
  %s1300 = scalar_lea.vmem %s1, 64
  %v1301 = vld [vmem:[%s1300] sm:$0xff]
  %v1303 = vsel %vm78, %v1301, 0
  %1305 = vmatpush.msra.mxu0 0.0
  %1306 = vmatpush.msra.mxu0 0.0
  %1307 = vmatpush.msra.mxu0 0.0
  %1308 = vmatpush.msra.mxu0 0.0
  %1309 = vmatpush.msra.mxu0 0.0
  %1310 = vmatpush.msra.mxu0 0.0
  %1311 = vmatpush.msra.mxu0 0.0
  %1312 = vmatpush.msra.mxu0 0.0
  %1313 = vmatpush.msra.mxu0 0.0
  %1314 = vmatpush.msra.mxu0 0.0
  %1315 = vmatpush.msra.mxu0 0.0
  %1316 = vmatpush.msra.mxu0 0.0
  %1317 = vmatpush.msra.mxu0 0.0
  %1318 = vmatpush.msra.mxu0 0.0
  %1319 = vmatpush.msra.mxu0 0.0
  %1320 = vmatpush.msra.mxu0 %v36
  %1321 = vmatmul.f32.gmra.mxu0 %v1303
  %v1322 = vpop.f32.mrf.mxu0
  %v1323 = vadd.f32 0.0, %v1322
  %1324 = vdwg.mxu0
  %1325 = vmatpush.msra.mxu0 0.0
  %1326 = vmatpush.msra.mxu0 0.0
  %1327 = vmatpush.msra.mxu0 0.0
  %1328 = vmatpush.msra.mxu0 0.0
  %1329 = vmatpush.msra.mxu0 0.0
  %1330 = vmatpush.msra.mxu0 0.0
  %1331 = vmatpush.msra.mxu0 0.0
  %1332 = vmatpush.msra.mxu0 0.0
  %1333 = vmatpush.msra.mxu0 0.0
  %1334 = vmatpush.msra.mxu0 0.0
  %1335 = vmatpush.msra.mxu0 0.0
  %1336 = vmatpush.msra.mxu0 0.0
  %1337 = vmatpush.msra.mxu0 0.0
  %1338 = vmatpush.msra.mxu0 0.0
  %1339 = vmatpush.msra.mxu0 0.0
  %1340 = vmatpush.msra.mxu0 %v37
  %1341 = vmatmul.f32.gmra.mxu0 %v1303
  %v1342 = vpop.f32.mrf.mxu0
  %v1343 = vadd.f32 0.0, %v1342
  %1344 = vdwg.mxu0
  %1345 = vmatpush.msra.mxu0 0.0
  %1346 = vmatpush.msra.mxu0 0.0
  %1347 = vmatpush.msra.mxu0 0.0
  %1348 = vmatpush.msra.mxu0 0.0
  %1349 = vmatpush.msra.mxu0 0.0
  %1350 = vmatpush.msra.mxu0 0.0
  %1351 = vmatpush.msra.mxu0 0.0
  %1352 = vmatpush.msra.mxu0 0.0
  %1353 = vmatpush.msra.mxu0 0.0
  %1354 = vmatpush.msra.mxu0 0.0
  %1355 = vmatpush.msra.mxu0 0.0
  %1356 = vmatpush.msra.mxu0 0.0
  %1357 = vmatpush.msra.mxu0 0.0
  %1358 = vmatpush.msra.mxu0 0.0
  %1359 = vmatpush.msra.mxu0 0.0
  %1360 = vmatpush.msra.mxu0 %v38
  %1361 = vmatmul.f32.gmra.mxu0 %v1303
  %v1362 = vpop.f32.mrf.mxu0
  %v1363 = vadd.f32 0.0, %v1362
  %1364 = vdwg.mxu0
  %1365 = vmatpush.msra.mxu0 0.0
  %1366 = vmatpush.msra.mxu0 0.0
  %1367 = vmatpush.msra.mxu0 0.0
  %1368 = vmatpush.msra.mxu0 0.0
  %1369 = vmatpush.msra.mxu0 0.0
  %1370 = vmatpush.msra.mxu0 0.0
  %1371 = vmatpush.msra.mxu0 0.0
  %1372 = vmatpush.msra.mxu0 0.0
  %1373 = vmatpush.msra.mxu0 0.0
  %1374 = vmatpush.msra.mxu0 0.0
  %1375 = vmatpush.msra.mxu0 0.0
  %1376 = vmatpush.msra.mxu0 0.0
  %1377 = vmatpush.msra.mxu0 0.0
  %1378 = vmatpush.msra.mxu0 0.0
  %1379 = vmatpush.msra.mxu0 0.0
  %1380 = vmatpush.msra.mxu0 %v39
  %1381 = vmatmul.f32.gmra.mxu0 %v1303
  %v1382 = vpop.f32.mrf.mxu0
  %v1383 = vadd.f32 0.0, %v1382
  %1384 = vdwg.mxu0
  %1385 = vmatpush.msra.mxu0 0.0
  %1386 = vmatpush.msra.mxu0 0.0
  %1387 = vmatpush.msra.mxu0 0.0
  %1388 = vmatpush.msra.mxu0 0.0
  %1389 = vmatpush.msra.mxu0 0.0
  %1390 = vmatpush.msra.mxu0 0.0
  %1391 = vmatpush.msra.mxu0 0.0
  %1392 = vmatpush.msra.mxu0 0.0
  %1393 = vmatpush.msra.mxu0 0.0
  %1394 = vmatpush.msra.mxu0 0.0
  %1395 = vmatpush.msra.mxu0 0.0
  %1396 = vmatpush.msra.mxu0 0.0
  %1397 = vmatpush.msra.mxu0 0.0
  %1398 = vmatpush.msra.mxu0 0.0
  %1399 = vmatpush.msra.mxu0 0.0
  %1400 = vmatpush.msra.mxu0 %v40
  %1401 = vmatmul.f32.gmra.mxu0 %v1303
  %v1402 = vpop.f32.mrf.mxu0
  %v1403 = vadd.f32 0.0, %v1402
  %1404 = vdwg.mxu0
  %1405 = vmatpush.msra.mxu0 0.0
  %1406 = vmatpush.msra.mxu0 0.0
  %1407 = vmatpush.msra.mxu0 0.0
  %1408 = vmatpush.msra.mxu0 0.0
  %1409 = vmatpush.msra.mxu0 0.0
  %1410 = vmatpush.msra.mxu0 0.0
  %1411 = vmatpush.msra.mxu0 0.0
  %1412 = vmatpush.msra.mxu0 0.0
  %1413 = vmatpush.msra.mxu0 0.0
  %1414 = vmatpush.msra.mxu0 0.0
  %1415 = vmatpush.msra.mxu0 0.0
  %1416 = vmatpush.msra.mxu0 0.0
  %1417 = vmatpush.msra.mxu0 0.0
  %1418 = vmatpush.msra.mxu0 0.0
  %1419 = vmatpush.msra.mxu0 0.0
  %1420 = vmatpush.msra.mxu0 %v41
  %1421 = vmatmul.f32.gmra.mxu0 %v1303
  %v1422 = vpop.f32.mrf.mxu0
  %v1423 = vadd.f32 0.0, %v1422
  %1424 = vdwg.mxu0
  %v1425 = vadd.f32 %v1294, %v1323
  %v1426 = vadd.f32 %v1295, %v1343
  %v1427 = vadd.f32 %v1296, %v1363
  %v1428 = vadd.f32 %v1297, %v1383
  %v1429 = vadd.f32 %v1298, %v1403
  %v1430 = vadd.f32 %v1299, %v1423
  %v1432 = vperm.slane %v32, 0
  %v1433 = vperm.slane %v32, 1
  %v1434 = vperm.slane %v32, 2
  %v1435 = vperm.slane %v32, 3
  %v1436 = vperm.slane %v32, 4
  %v1437 = vperm.slane %v32, 5
  %v1444 = vmul.f32 %v1425, %v1432
  %v1445 = vmul.f32 %v1426, %v1433
  %v1446 = vmul.f32 %v1427, %v1434
  %v1447 = vmul.f32 %v1428, %v1435
  %v1448 = vmul.f32 %v1429, %v1436
  %v1449 = vmul.f32 %v1430, %v1437
  %v1450 = vadd.f32 %v1444, %v1445
  %v1451 = vadd.f32 %v1450, %v1446
  %v1452 = vadd.f32 %v1451, %v1447
  %v1453 = vadd.f32 %v1452, %v1448
  %vm1454 = vcmask 375808
  %v1455 = vsel %vm1454, %v1449, 0.0
  %v1456 = vadd.f32 %v1453, %v1455
  %1457 = vadd.xlane.f32.xlu0 %v1456
  %v1458 = vpop.xlane.xlu0 %1457
  %v1459 = vmul.f32 %v1458, 0.001953125
  %v1460 = vmul.f32 %v1444, %v1425
  %v1461 = vmul.f32 %v1445, %v1426
  %v1462 = vmul.f32 %v1446, %v1427
  %v1463 = vmul.f32 %v1447, %v1428
  %v1464 = vmul.f32 %v1448, %v1429
  %v1465 = vmul.f32 %v1449, %v1430
  %v1466 = vadd.f32 %v1460, %v1461
  %v1467 = vadd.f32 %v1466, %v1462
  %v1468 = vadd.f32 %v1467, %v1463
  %v1469 = vadd.f32 %v1468, %v1464
  %v1470 = vsel %vm1454, %v1465, 0.0
  %v1471 = vadd.f32 %v1469, %v1470
  %1472 = vadd.xlane.f32.xlu0 %v1471
  %v1473 = vpop.xlane.xlu0 %1472
  %v1474 = vmul.f32 %v1473, 0.001953125
  %v1475 = vmul.f32 %v1459, %v1459
  %v1476 = vsub.f32 %v1474, %v1475
  %v1477 = vld [vmem:[%s2] sm:$0xff]
  %v1478 = vadd.f32 %v1476, 1e-05
  %v1479 = vrsqrt.pop %v1478
  %v1480 = vmul.f32 %v1479, %v1478
  %v1481 = vmul.f32 %v1480, %v1479
  %v1482 = vmul.f32 0.5, %v1481
  %v1483 = vsub.f32 1.5, %v1482
  %v1484 = vmul.f32 %v1479, %v1483
  %vm1485 = vweird.f32 %v1478
  %vm1486 = vweird.f32 %v1479
  %vm1487 = vmor %vm1485, %vm1486
  %v1488 = vsel %vm1487, %v1479, %v1484
  %v1489 = vmul.f32 %v1477, %v1488
  %v1490 = vld [vmem:[%s3] sm:$0xff]
  %v1491 = vmul.f32 %v1459, %v1489
  %v1492 = vsub.f32 %v1490, %v1491
  %1494 = vset.pattern.permute.xlu0 0
  %1495 = vperm.xlu0 %1494, %v1489
  %v1496 = vpop.permute.xlu0 %1495
  %v1498 = vmul.f32 %v1425, %v1496
  %v1499 = vmul.f32 %v1426, %v1496
  %v1500 = vmul.f32 %v1427, %v1496
  %v1501 = vmul.f32 %v1428, %v1496
  %v1502 = vmul.f32 %v1429, %v1496
  %v1503 = vmul.f32 %v1430, %v1496
  %1505 = vset.pattern.permute.xlu0 0
  %1506 = vperm.xlu0 %1505, %v1492
  %v1507 = vpop.permute.xlu0 %1506
  %v1509 = vadd.f32 %v1498, %v1507
  %v1510 = vadd.f32 %v1499, %v1507
  %v1511 = vadd.f32 %v1500, %v1507
  %v1512 = vadd.f32 %v1501, %v1507
  %v1513 = vadd.f32 %v1502, %v1507
  %v1514 = vadd.f32 %v1503, %v1507
  %v1515 = vmax.f32 %v1509, 0.0
  %v1516 = vmax.f32 %v1510, 0.0
  %v1517 = vmax.f32 %v1511, 0.0
  %v1518 = vmax.f32 %v1512, 0.0
  %v1519 = vmax.f32 %v1513, 0.0
  %v1520 = vmax.f32 %v1514, 0.0
  %v1521 = vmul.f32 %v1515, %v1432
  %v1522 = vmul.f32 %v1516, %v1433
  %v1523 = vmul.f32 %v1517, %v1434
  %v1524 = vmul.f32 %v1518, %v1435
  %v1525 = vmul.f32 %v1519, %v1436
  %v1526 = vmul.f32 %v1520, %v1437
  %v1527 = vld [vmem:[%s4] sm:$0xff]
  %s1528 = scalar_lea.vmem %s4, 8
  %v1529 = vld [vmem:[%s1528] sm:$0xff]
  %1536 = vrot.lane.b32.xlu0 %v1521, 127
  %v1537 = vpop.permute.xlu0 %1536
  %1538 = vrot.lane.b32.xlu0 %v1522, 127
  %v1539 = vpop.permute.xlu0 %1538
  %1540 = vrot.lane.b32.xlu0 %v1523, 127
  %v1541 = vpop.permute.xlu0 %1540
  %1542 = vrot.lane.b32.xlu0 %v1524, 127
  %v1543 = vpop.permute.xlu0 %1542
  %1544 = vrot.lane.b32.xlu0 %v1525, 127
  %v1545 = vpop.permute.xlu0 %1544
  %1546 = vrot.lane.b32.xlu0 %v1526, 127
  %v1547 = vpop.permute.xlu0 %1546
  %vm1548 = vcmask 1039360
  %v1549 = vsel %vm1548, %v1537, %v1539
  %v1550 = vsel %vm1548, %v1539, %v1541
  %v1551 = vsel %vm1548, %v1541, %v1543
  %v1552 = vsel %vm1548, %v1543, %v1545
  %v1553 = vsel %vm1548, %v1545, %v1547
  %v1561 = vsel %vm78, %v1529, 0
  %1563 = vmatpush.msra.mxu0 0.0
  %1564 = vmatpush.msra.mxu0 0.0
  %1565 = vmatpush.msra.mxu0 0.0
  %1566 = vmatpush.msra.mxu0 0.0
  %1567 = vmatpush.msra.mxu0 0.0
  %1568 = vmatpush.msra.mxu0 0.0
  %1569 = vmatpush.msra.mxu0 0.0
  %1570 = vmatpush.msra.mxu0 0.0
  %1571 = vmatpush.msra.mxu0 0.0
  %1572 = vmatpush.msra.mxu0 0.0
  %1573 = vmatpush.msra.mxu0 0.0
  %1574 = vmatpush.msra.mxu0 0.0
  %1575 = vmatpush.msra.mxu0 0.0
  %1576 = vmatpush.msra.mxu0 0.0
  %1577 = vmatpush.msra.mxu0 0.0
  %1578 = vmatpush.msra.mxu0 %v1549
  %1579 = vmatmul.f32.gmra.mxu0 %v1561
  %v1580 = vpop.f32.mrf.mxu0
  %v1581 = vadd.f32 0.0, %v1580
  %1582 = vdwg.mxu0
  %1583 = vmatpush.msra.mxu0 0.0
  %1584 = vmatpush.msra.mxu0 0.0
  %1585 = vmatpush.msra.mxu0 0.0
  %1586 = vmatpush.msra.mxu0 0.0
  %1587 = vmatpush.msra.mxu0 0.0
  %1588 = vmatpush.msra.mxu0 0.0
  %1589 = vmatpush.msra.mxu0 0.0
  %1590 = vmatpush.msra.mxu0 0.0
  %1591 = vmatpush.msra.mxu0 0.0
  %1592 = vmatpush.msra.mxu0 0.0
  %1593 = vmatpush.msra.mxu0 0.0
  %1594 = vmatpush.msra.mxu0 0.0
  %1595 = vmatpush.msra.mxu0 0.0
  %1596 = vmatpush.msra.mxu0 0.0
  %1597 = vmatpush.msra.mxu0 0.0
  %1598 = vmatpush.msra.mxu0 %v1550
  %1599 = vmatmul.f32.gmra.mxu0 %v1561
  %v1600 = vpop.f32.mrf.mxu0
  %v1601 = vadd.f32 0.0, %v1600
  %1602 = vdwg.mxu0
  %1603 = vmatpush.msra.mxu0 0.0
  %1604 = vmatpush.msra.mxu0 0.0
  %1605 = vmatpush.msra.mxu0 0.0
  %1606 = vmatpush.msra.mxu0 0.0
  %1607 = vmatpush.msra.mxu0 0.0
  %1608 = vmatpush.msra.mxu0 0.0
  %1609 = vmatpush.msra.mxu0 0.0
  %1610 = vmatpush.msra.mxu0 0.0
  %1611 = vmatpush.msra.mxu0 0.0
  %1612 = vmatpush.msra.mxu0 0.0
  %1613 = vmatpush.msra.mxu0 0.0
  %1614 = vmatpush.msra.mxu0 0.0
  %1615 = vmatpush.msra.mxu0 0.0
  %1616 = vmatpush.msra.mxu0 0.0
  %1617 = vmatpush.msra.mxu0 0.0
  %1618 = vmatpush.msra.mxu0 %v1551
  %1619 = vmatmul.f32.gmra.mxu0 %v1561
  %v1620 = vpop.f32.mrf.mxu0
  %v1621 = vadd.f32 0.0, %v1620
  %1622 = vdwg.mxu0
  %1623 = vmatpush.msra.mxu0 0.0
  %1624 = vmatpush.msra.mxu0 0.0
  %1625 = vmatpush.msra.mxu0 0.0
  %1626 = vmatpush.msra.mxu0 0.0
  %1627 = vmatpush.msra.mxu0 0.0
  %1628 = vmatpush.msra.mxu0 0.0
  %1629 = vmatpush.msra.mxu0 0.0
  %1630 = vmatpush.msra.mxu0 0.0
  %1631 = vmatpush.msra.mxu0 0.0
  %1632 = vmatpush.msra.mxu0 0.0
  %1633 = vmatpush.msra.mxu0 0.0
  %1634 = vmatpush.msra.mxu0 0.0
  %1635 = vmatpush.msra.mxu0 0.0
  %1636 = vmatpush.msra.mxu0 0.0
  %1637 = vmatpush.msra.mxu0 0.0
  %1638 = vmatpush.msra.mxu0 %v1552
  %1639 = vmatmul.f32.gmra.mxu0 %v1561
  %v1640 = vpop.f32.mrf.mxu0
  %v1641 = vadd.f32 0.0, %v1640
  %1642 = vdwg.mxu0
  %1643 = vmatpush.msra.mxu0 0.0
  %1644 = vmatpush.msra.mxu0 0.0
  %1645 = vmatpush.msra.mxu0 0.0
  %1646 = vmatpush.msra.mxu0 0.0
  %1647 = vmatpush.msra.mxu0 0.0
  %1648 = vmatpush.msra.mxu0 0.0
  %1649 = vmatpush.msra.mxu0 0.0
  %1650 = vmatpush.msra.mxu0 0.0
  %1651 = vmatpush.msra.mxu0 0.0
  %1652 = vmatpush.msra.mxu0 0.0
  %1653 = vmatpush.msra.mxu0 0.0
  %1654 = vmatpush.msra.mxu0 0.0
  %1655 = vmatpush.msra.mxu0 0.0
  %1656 = vmatpush.msra.mxu0 0.0
  %1657 = vmatpush.msra.mxu0 0.0
  %1658 = vmatpush.msra.mxu0 %v1553
  %1659 = vmatmul.f32.gmra.mxu0 %v1561
  %v1660 = vpop.f32.mrf.mxu0
  %v1661 = vadd.f32 0.0, %v1660
  %1662 = vdwg.mxu0
  %1663 = vmatpush.msra.mxu0 0.0
  %1664 = vmatpush.msra.mxu0 0.0
  %1665 = vmatpush.msra.mxu0 0.0
  %1666 = vmatpush.msra.mxu0 0.0
  %1667 = vmatpush.msra.mxu0 0.0
  %1668 = vmatpush.msra.mxu0 0.0
  %1669 = vmatpush.msra.mxu0 0.0
  %1670 = vmatpush.msra.mxu0 0.0
  %1671 = vmatpush.msra.mxu0 0.0
  %1672 = vmatpush.msra.mxu0 0.0
  %1673 = vmatpush.msra.mxu0 0.0
  %1674 = vmatpush.msra.mxu0 0.0
  %1675 = vmatpush.msra.mxu0 0.0
  %1676 = vmatpush.msra.mxu0 0.0
  %1677 = vmatpush.msra.mxu0 0.0
  %1678 = vmatpush.msra.mxu0 %v1547
  %1679 = vmatmul.f32.gmra.mxu0 %v1561
  %v1680 = vpop.f32.mrf.mxu0
  %v1681 = vadd.f32 0.0, %v1680
  %1682 = vdwg.mxu0
  %v1684 = vsel %vm78, %v1527, 0
  %1686 = vmatpush.msra.mxu0 0.0
  %1687 = vmatpush.msra.mxu0 0.0
  %1688 = vmatpush.msra.mxu0 0.0
  %1689 = vmatpush.msra.mxu0 0.0
  %1690 = vmatpush.msra.mxu0 0.0
  %1691 = vmatpush.msra.mxu0 0.0
  %1692 = vmatpush.msra.mxu0 0.0
  %1693 = vmatpush.msra.mxu0 0.0
  %1694 = vmatpush.msra.mxu0 0.0
  %1695 = vmatpush.msra.mxu0 0.0
  %1696 = vmatpush.msra.mxu0 0.0
  %1697 = vmatpush.msra.mxu0 0.0
  %1698 = vmatpush.msra.mxu0 0.0
  %1699 = vmatpush.msra.mxu0 0.0
  %1700 = vmatpush.msra.mxu0 0.0
  %1701 = vmatpush.msra.mxu0 %v1521
  %1702 = vmatmul.f32.gmra.mxu0 %v1684
  %v1703 = vpop.f32.mrf.mxu0
  %v1704 = vadd.f32 %v1581, %v1703
  %1705 = vdwg.mxu0
  %1706 = vmatpush.msra.mxu0 0.0
  %1707 = vmatpush.msra.mxu0 0.0
  %1708 = vmatpush.msra.mxu0 0.0
  %1709 = vmatpush.msra.mxu0 0.0
  %1710 = vmatpush.msra.mxu0 0.0
  %1711 = vmatpush.msra.mxu0 0.0
  %1712 = vmatpush.msra.mxu0 0.0
  %1713 = vmatpush.msra.mxu0 0.0
  %1714 = vmatpush.msra.mxu0 0.0
  %1715 = vmatpush.msra.mxu0 0.0
  %1716 = vmatpush.msra.mxu0 0.0
  %1717 = vmatpush.msra.mxu0 0.0
  %1718 = vmatpush.msra.mxu0 0.0
  %1719 = vmatpush.msra.mxu0 0.0
  %1720 = vmatpush.msra.mxu0 0.0
  %1721 = vmatpush.msra.mxu0 %v1522
  %1722 = vmatmul.f32.gmra.mxu0 %v1684
  %v1723 = vpop.f32.mrf.mxu0
  %v1724 = vadd.f32 %v1601, %v1723
  %1725 = vdwg.mxu0
  %1726 = vmatpush.msra.mxu0 0.0
  %1727 = vmatpush.msra.mxu0 0.0
  %1728 = vmatpush.msra.mxu0 0.0
  %1729 = vmatpush.msra.mxu0 0.0
  %1730 = vmatpush.msra.mxu0 0.0
  %1731 = vmatpush.msra.mxu0 0.0
  %1732 = vmatpush.msra.mxu0 0.0
  %1733 = vmatpush.msra.mxu0 0.0
  %1734 = vmatpush.msra.mxu0 0.0
  %1735 = vmatpush.msra.mxu0 0.0
  %1736 = vmatpush.msra.mxu0 0.0
  %1737 = vmatpush.msra.mxu0 0.0
  %1738 = vmatpush.msra.mxu0 0.0
  %1739 = vmatpush.msra.mxu0 0.0
  %1740 = vmatpush.msra.mxu0 0.0
  %1741 = vmatpush.msra.mxu0 %v1523
  %1742 = vmatmul.f32.gmra.mxu0 %v1684
  %v1743 = vpop.f32.mrf.mxu0
  %v1744 = vadd.f32 %v1621, %v1743
  %1745 = vdwg.mxu0
  %1746 = vmatpush.msra.mxu0 0.0
  %1747 = vmatpush.msra.mxu0 0.0
  %1748 = vmatpush.msra.mxu0 0.0
  %1749 = vmatpush.msra.mxu0 0.0
  %1750 = vmatpush.msra.mxu0 0.0
  %1751 = vmatpush.msra.mxu0 0.0
  %1752 = vmatpush.msra.mxu0 0.0
  %1753 = vmatpush.msra.mxu0 0.0
  %1754 = vmatpush.msra.mxu0 0.0
  %1755 = vmatpush.msra.mxu0 0.0
  %1756 = vmatpush.msra.mxu0 0.0
  %1757 = vmatpush.msra.mxu0 0.0
  %1758 = vmatpush.msra.mxu0 0.0
  %1759 = vmatpush.msra.mxu0 0.0
  %1760 = vmatpush.msra.mxu0 0.0
  %1761 = vmatpush.msra.mxu0 %v1524
  %1762 = vmatmul.f32.gmra.mxu0 %v1684
  %v1763 = vpop.f32.mrf.mxu0
  %v1764 = vadd.f32 %v1641, %v1763
  %1765 = vdwg.mxu0
  %1766 = vmatpush.msra.mxu0 0.0
  %1767 = vmatpush.msra.mxu0 0.0
  %1768 = vmatpush.msra.mxu0 0.0
  %1769 = vmatpush.msra.mxu0 0.0
  %1770 = vmatpush.msra.mxu0 0.0
  %1771 = vmatpush.msra.mxu0 0.0
  %1772 = vmatpush.msra.mxu0 0.0
  %1773 = vmatpush.msra.mxu0 0.0
  %1774 = vmatpush.msra.mxu0 0.0
  %1775 = vmatpush.msra.mxu0 0.0
  %1776 = vmatpush.msra.mxu0 0.0
  %1777 = vmatpush.msra.mxu0 0.0
  %1778 = vmatpush.msra.mxu0 0.0
  %1779 = vmatpush.msra.mxu0 0.0
  %1780 = vmatpush.msra.mxu0 0.0
  %1781 = vmatpush.msra.mxu0 %v1525
  %1782 = vmatmul.f32.gmra.mxu0 %v1684
  %v1783 = vpop.f32.mrf.mxu0
  %v1784 = vadd.f32 %v1661, %v1783
  %1785 = vdwg.mxu0
  %1786 = vmatpush.msra.mxu0 0.0
  %1787 = vmatpush.msra.mxu0 0.0
  %1788 = vmatpush.msra.mxu0 0.0
  %1789 = vmatpush.msra.mxu0 0.0
  %1790 = vmatpush.msra.mxu0 0.0
  %1791 = vmatpush.msra.mxu0 0.0
  %1792 = vmatpush.msra.mxu0 0.0
  %1793 = vmatpush.msra.mxu0 0.0
  %1794 = vmatpush.msra.mxu0 0.0
  %1795 = vmatpush.msra.mxu0 0.0
  %1796 = vmatpush.msra.mxu0 0.0
  %1797 = vmatpush.msra.mxu0 0.0
  %1798 = vmatpush.msra.mxu0 0.0
  %1799 = vmatpush.msra.mxu0 0.0
  %1800 = vmatpush.msra.mxu0 0.0
  %1801 = vmatpush.msra.mxu0 %v1526
  %1802 = vmatmul.f32.gmra.mxu0 %v1684
  %v1803 = vpop.f32.mrf.mxu0
  %v1804 = vadd.f32 %v1681, %v1803
  %1805 = vdwg.mxu0
  %s1806 = scalar_lea.vmem %s4, 16
  %v1807 = vld [vmem:[%s1806] sm:$0xff]
  %1808 = vrot.lane.b32.xlu0 %v1521, 126
  %v1809 = vpop.permute.xlu0 %1808
  %1810 = vrot.lane.b32.xlu0 %v1522, 126
  %v1811 = vpop.permute.xlu0 %1810
  %1812 = vrot.lane.b32.xlu0 %v1523, 126
  %v1813 = vpop.permute.xlu0 %1812
  %1814 = vrot.lane.b32.xlu0 %v1524, 126
  %v1815 = vpop.permute.xlu0 %1814
  %1816 = vrot.lane.b32.xlu0 %v1525, 126
  %v1817 = vpop.permute.xlu0 %1816
  %1818 = vrot.lane.b32.xlu0 %v1526, 126
  %v1819 = vpop.permute.xlu0 %1818
  %vm1820 = vcmask 1031168
  %v1821 = vsel %vm1820, %v1809, %v1811
  %v1822 = vsel %vm1820, %v1811, %v1813
  %v1823 = vsel %vm1820, %v1813, %v1815
  %v1824 = vsel %vm1820, %v1815, %v1817
  %v1825 = vsel %vm1820, %v1817, %v1819
  %v1833 = vsel %vm78, %v1807, 0
  %1835 = vmatpush.msra.mxu0 0.0
  %1836 = vmatpush.msra.mxu0 0.0
  %1837 = vmatpush.msra.mxu0 0.0
  %1838 = vmatpush.msra.mxu0 0.0
  %1839 = vmatpush.msra.mxu0 0.0
  %1840 = vmatpush.msra.mxu0 0.0
  %1841 = vmatpush.msra.mxu0 0.0
  %1842 = vmatpush.msra.mxu0 0.0
  %1843 = vmatpush.msra.mxu0 0.0
  %1844 = vmatpush.msra.mxu0 0.0
  %1845 = vmatpush.msra.mxu0 0.0
  %1846 = vmatpush.msra.mxu0 0.0
  %1847 = vmatpush.msra.mxu0 0.0
  %1848 = vmatpush.msra.mxu0 0.0
  %1849 = vmatpush.msra.mxu0 0.0
  %1850 = vmatpush.msra.mxu0 %v1821
  %1851 = vmatmul.f32.gmra.mxu0 %v1833
  %v1852 = vpop.f32.mrf.mxu0
  %v1853 = vadd.f32 0.0, %v1852
  %1854 = vdwg.mxu0
  %1855 = vmatpush.msra.mxu0 0.0
  %1856 = vmatpush.msra.mxu0 0.0
  %1857 = vmatpush.msra.mxu0 0.0
  %1858 = vmatpush.msra.mxu0 0.0
  %1859 = vmatpush.msra.mxu0 0.0
  %1860 = vmatpush.msra.mxu0 0.0
  %1861 = vmatpush.msra.mxu0 0.0
  %1862 = vmatpush.msra.mxu0 0.0
  %1863 = vmatpush.msra.mxu0 0.0
  %1864 = vmatpush.msra.mxu0 0.0
  %1865 = vmatpush.msra.mxu0 0.0
  %1866 = vmatpush.msra.mxu0 0.0
  %1867 = vmatpush.msra.mxu0 0.0
  %1868 = vmatpush.msra.mxu0 0.0
  %1869 = vmatpush.msra.mxu0 0.0
  %1870 = vmatpush.msra.mxu0 %v1822
  %1871 = vmatmul.f32.gmra.mxu0 %v1833
  %v1872 = vpop.f32.mrf.mxu0
  %v1873 = vadd.f32 0.0, %v1872
  %1874 = vdwg.mxu0
  %1875 = vmatpush.msra.mxu0 0.0
  %1876 = vmatpush.msra.mxu0 0.0
  %1877 = vmatpush.msra.mxu0 0.0
  %1878 = vmatpush.msra.mxu0 0.0
  %1879 = vmatpush.msra.mxu0 0.0
  %1880 = vmatpush.msra.mxu0 0.0
  %1881 = vmatpush.msra.mxu0 0.0
  %1882 = vmatpush.msra.mxu0 0.0
  %1883 = vmatpush.msra.mxu0 0.0
  %1884 = vmatpush.msra.mxu0 0.0
  %1885 = vmatpush.msra.mxu0 0.0
  %1886 = vmatpush.msra.mxu0 0.0
  %1887 = vmatpush.msra.mxu0 0.0
  %1888 = vmatpush.msra.mxu0 0.0
  %1889 = vmatpush.msra.mxu0 0.0
  %1890 = vmatpush.msra.mxu0 %v1823
  %1891 = vmatmul.f32.gmra.mxu0 %v1833
  %v1892 = vpop.f32.mrf.mxu0
  %v1893 = vadd.f32 0.0, %v1892
  %1894 = vdwg.mxu0
  %1895 = vmatpush.msra.mxu0 0.0
  %1896 = vmatpush.msra.mxu0 0.0
  %1897 = vmatpush.msra.mxu0 0.0
  %1898 = vmatpush.msra.mxu0 0.0
  %1899 = vmatpush.msra.mxu0 0.0
  %1900 = vmatpush.msra.mxu0 0.0
  %1901 = vmatpush.msra.mxu0 0.0
  %1902 = vmatpush.msra.mxu0 0.0
  %1903 = vmatpush.msra.mxu0 0.0
  %1904 = vmatpush.msra.mxu0 0.0
  %1905 = vmatpush.msra.mxu0 0.0
  %1906 = vmatpush.msra.mxu0 0.0
  %1907 = vmatpush.msra.mxu0 0.0
  %1908 = vmatpush.msra.mxu0 0.0
  %1909 = vmatpush.msra.mxu0 0.0
  %1910 = vmatpush.msra.mxu0 %v1824
  %1911 = vmatmul.f32.gmra.mxu0 %v1833
  %v1912 = vpop.f32.mrf.mxu0
  %v1913 = vadd.f32 0.0, %v1912
  %1914 = vdwg.mxu0
  %1915 = vmatpush.msra.mxu0 0.0
  %1916 = vmatpush.msra.mxu0 0.0
  %1917 = vmatpush.msra.mxu0 0.0
  %1918 = vmatpush.msra.mxu0 0.0
  %1919 = vmatpush.msra.mxu0 0.0
  %1920 = vmatpush.msra.mxu0 0.0
  %1921 = vmatpush.msra.mxu0 0.0
  %1922 = vmatpush.msra.mxu0 0.0
  %1923 = vmatpush.msra.mxu0 0.0
  %1924 = vmatpush.msra.mxu0 0.0
  %1925 = vmatpush.msra.mxu0 0.0
  %1926 = vmatpush.msra.mxu0 0.0
  %1927 = vmatpush.msra.mxu0 0.0
  %1928 = vmatpush.msra.mxu0 0.0
  %1929 = vmatpush.msra.mxu0 0.0
  %1930 = vmatpush.msra.mxu0 %v1825
  %1931 = vmatmul.f32.gmra.mxu0 %v1833
  %v1932 = vpop.f32.mrf.mxu0
  %v1933 = vadd.f32 0.0, %v1932
  %1934 = vdwg.mxu0
  %1935 = vmatpush.msra.mxu0 0.0
  %1936 = vmatpush.msra.mxu0 0.0
  %1937 = vmatpush.msra.mxu0 0.0
  %1938 = vmatpush.msra.mxu0 0.0
  %1939 = vmatpush.msra.mxu0 0.0
  %1940 = vmatpush.msra.mxu0 0.0
  %1941 = vmatpush.msra.mxu0 0.0
  %1942 = vmatpush.msra.mxu0 0.0
  %1943 = vmatpush.msra.mxu0 0.0
  %1944 = vmatpush.msra.mxu0 0.0
  %1945 = vmatpush.msra.mxu0 0.0
  %1946 = vmatpush.msra.mxu0 0.0
  %1947 = vmatpush.msra.mxu0 0.0
  %1948 = vmatpush.msra.mxu0 0.0
  %1949 = vmatpush.msra.mxu0 0.0
  %1950 = vmatpush.msra.mxu0 %v1819
  %1951 = vmatmul.f32.gmra.mxu0 %v1833
  %v1952 = vpop.f32.mrf.mxu0
  %v1953 = vadd.f32 0.0, %v1952
  %1954 = vdwg.mxu0
  %v1955 = vadd.f32 %v1704, %v1853
  %v1956 = vadd.f32 %v1724, %v1873
  %v1957 = vadd.f32 %v1744, %v1893
  %v1958 = vadd.f32 %v1764, %v1913
  %v1959 = vadd.f32 %v1784, %v1933
  %v1960 = vadd.f32 %v1804, %v1953
  %s1961 = scalar_lea.vmem %s4, 24
  %v1962 = vld [vmem:[%s1961] sm:$0xff]
  %1963 = vrot.lane.b32.xlu0 %v1521, 110
  %v1964 = vpop.permute.xlu0 %1963
  %1965 = vrot.lane.b32.xlu0 %v1522, 110
  %v1966 = vpop.permute.xlu0 %1965
  %1967 = vrot.lane.b32.xlu0 %v1523, 110
  %v1968 = vpop.permute.xlu0 %1967
  %1969 = vrot.lane.b32.xlu0 %v1524, 110
  %v1970 = vpop.permute.xlu0 %1969
  %1971 = vrot.lane.b32.xlu0 %v1525, 110
  %v1972 = vpop.permute.xlu0 %1971
  %1973 = vrot.lane.b32.xlu0 %v1526, 110
  %v1974 = vpop.permute.xlu0 %1973
  %vm1975 = vcmask 900096
  %v1976 = vsel %vm1975, %v1964, %v1966
  %v1977 = vsel %vm1975, %v1966, %v1968
  %v1978 = vsel %vm1975, %v1968, %v1970
  %v1979 = vsel %vm1975, %v1970, %v1972
  %v1980 = vsel %vm1975, %v1972, %v1974
  %v1988 = vsel %vm78, %v1962, 0
  %1990 = vmatpush.msra.mxu0 0.0
  %1991 = vmatpush.msra.mxu0 0.0
  %1992 = vmatpush.msra.mxu0 0.0
  %1993 = vmatpush.msra.mxu0 0.0
  %1994 = vmatpush.msra.mxu0 0.0
  %1995 = vmatpush.msra.mxu0 0.0
  %1996 = vmatpush.msra.mxu0 0.0
  %1997 = vmatpush.msra.mxu0 0.0
  %1998 = vmatpush.msra.mxu0 0.0
  %1999 = vmatpush.msra.mxu0 0.0
  %2000 = vmatpush.msra.mxu0 0.0
  %2001 = vmatpush.msra.mxu0 0.0
  %2002 = vmatpush.msra.mxu0 0.0
  %2003 = vmatpush.msra.mxu0 0.0
  %2004 = vmatpush.msra.mxu0 0.0
  %2005 = vmatpush.msra.mxu0 %v1976
  %2006 = vmatmul.f32.gmra.mxu0 %v1988
  %v2007 = vpop.f32.mrf.mxu0
  %v2008 = vadd.f32 0.0, %v2007
  %2009 = vdwg.mxu0
  %2010 = vmatpush.msra.mxu0 0.0
  %2011 = vmatpush.msra.mxu0 0.0
  %2012 = vmatpush.msra.mxu0 0.0
  %2013 = vmatpush.msra.mxu0 0.0
  %2014 = vmatpush.msra.mxu0 0.0
  %2015 = vmatpush.msra.mxu0 0.0
  %2016 = vmatpush.msra.mxu0 0.0
  %2017 = vmatpush.msra.mxu0 0.0
  %2018 = vmatpush.msra.mxu0 0.0
  %2019 = vmatpush.msra.mxu0 0.0
  %2020 = vmatpush.msra.mxu0 0.0
  %2021 = vmatpush.msra.mxu0 0.0
  %2022 = vmatpush.msra.mxu0 0.0
  %2023 = vmatpush.msra.mxu0 0.0
  %2024 = vmatpush.msra.mxu0 0.0
  %2025 = vmatpush.msra.mxu0 %v1977
  %2026 = vmatmul.f32.gmra.mxu0 %v1988
  %v2027 = vpop.f32.mrf.mxu0
  %v2028 = vadd.f32 0.0, %v2027
  %2029 = vdwg.mxu0
  %2030 = vmatpush.msra.mxu0 0.0
  %2031 = vmatpush.msra.mxu0 0.0
  %2032 = vmatpush.msra.mxu0 0.0
  %2033 = vmatpush.msra.mxu0 0.0
  %2034 = vmatpush.msra.mxu0 0.0
  %2035 = vmatpush.msra.mxu0 0.0
  %2036 = vmatpush.msra.mxu0 0.0
  %2037 = vmatpush.msra.mxu0 0.0
  %2038 = vmatpush.msra.mxu0 0.0
  %2039 = vmatpush.msra.mxu0 0.0
  %2040 = vmatpush.msra.mxu0 0.0
  %2041 = vmatpush.msra.mxu0 0.0
  %2042 = vmatpush.msra.mxu0 0.0
  %2043 = vmatpush.msra.mxu0 0.0
  %2044 = vmatpush.msra.mxu0 0.0
  %2045 = vmatpush.msra.mxu0 %v1978
  %2046 = vmatmul.f32.gmra.mxu0 %v1988
  %v2047 = vpop.f32.mrf.mxu0
  %v2048 = vadd.f32 0.0, %v2047
  %2049 = vdwg.mxu0
  %2050 = vmatpush.msra.mxu0 0.0
  %2051 = vmatpush.msra.mxu0 0.0
  %2052 = vmatpush.msra.mxu0 0.0
  %2053 = vmatpush.msra.mxu0 0.0
  %2054 = vmatpush.msra.mxu0 0.0
  %2055 = vmatpush.msra.mxu0 0.0
  %2056 = vmatpush.msra.mxu0 0.0
  %2057 = vmatpush.msra.mxu0 0.0
  %2058 = vmatpush.msra.mxu0 0.0
  %2059 = vmatpush.msra.mxu0 0.0
  %2060 = vmatpush.msra.mxu0 0.0
  %2061 = vmatpush.msra.mxu0 0.0
  %2062 = vmatpush.msra.mxu0 0.0
  %2063 = vmatpush.msra.mxu0 0.0
  %2064 = vmatpush.msra.mxu0 0.0
  %2065 = vmatpush.msra.mxu0 %v1979
  %2066 = vmatmul.f32.gmra.mxu0 %v1988
  %v2067 = vpop.f32.mrf.mxu0
  %v2068 = vadd.f32 0.0, %v2067
  %2069 = vdwg.mxu0
  %2070 = vmatpush.msra.mxu0 0.0
  %2071 = vmatpush.msra.mxu0 0.0
  %2072 = vmatpush.msra.mxu0 0.0
  %2073 = vmatpush.msra.mxu0 0.0
  %2074 = vmatpush.msra.mxu0 0.0
  %2075 = vmatpush.msra.mxu0 0.0
  %2076 = vmatpush.msra.mxu0 0.0
  %2077 = vmatpush.msra.mxu0 0.0
  %2078 = vmatpush.msra.mxu0 0.0
  %2079 = vmatpush.msra.mxu0 0.0
  %2080 = vmatpush.msra.mxu0 0.0
  %2081 = vmatpush.msra.mxu0 0.0
  %2082 = vmatpush.msra.mxu0 0.0
  %2083 = vmatpush.msra.mxu0 0.0
  %2084 = vmatpush.msra.mxu0 0.0
  %2085 = vmatpush.msra.mxu0 %v1980
  %2086 = vmatmul.f32.gmra.mxu0 %v1988
  %v2087 = vpop.f32.mrf.mxu0
  %v2088 = vadd.f32 0.0, %v2087
  %2089 = vdwg.mxu0
  %2090 = vmatpush.msra.mxu0 0.0
  %2091 = vmatpush.msra.mxu0 0.0
  %2092 = vmatpush.msra.mxu0 0.0
  %2093 = vmatpush.msra.mxu0 0.0
  %2094 = vmatpush.msra.mxu0 0.0
  %2095 = vmatpush.msra.mxu0 0.0
  %2096 = vmatpush.msra.mxu0 0.0
  %2097 = vmatpush.msra.mxu0 0.0
  %2098 = vmatpush.msra.mxu0 0.0
  %2099 = vmatpush.msra.mxu0 0.0
  %2100 = vmatpush.msra.mxu0 0.0
  %2101 = vmatpush.msra.mxu0 0.0
  %2102 = vmatpush.msra.mxu0 0.0
  %2103 = vmatpush.msra.mxu0 0.0
  %2104 = vmatpush.msra.mxu0 0.0
  %2105 = vmatpush.msra.mxu0 %v1974
  %2106 = vmatmul.f32.gmra.mxu0 %v1988
  %v2107 = vpop.f32.mrf.mxu0
  %v2108 = vadd.f32 0.0, %v2107
  %2109 = vdwg.mxu0
  %v2110 = vadd.f32 %v1955, %v2008
  %v2111 = vadd.f32 %v1956, %v2028
  %v2112 = vadd.f32 %v1957, %v2048
  %v2113 = vadd.f32 %v1958, %v2068
  %v2114 = vadd.f32 %v1959, %v2088
  %v2115 = vadd.f32 %v1960, %v2108
  %s2116 = scalar_lea.vmem %s4, 32
  %v2117 = vld [vmem:[%s2116] sm:$0xff]
  %2118 = vrot.lane.b32.xlu0 %v1521, 109
  %v2119 = vpop.permute.xlu0 %2118
  %2120 = vrot.lane.b32.xlu0 %v1522, 109
  %v2121 = vpop.permute.xlu0 %2120
  %2122 = vrot.lane.b32.xlu0 %v1523, 109
  %v2123 = vpop.permute.xlu0 %2122
  %2124 = vrot.lane.b32.xlu0 %v1524, 109
  %v2125 = vpop.permute.xlu0 %2124
  %2126 = vrot.lane.b32.xlu0 %v1525, 109
  %v2127 = vpop.permute.xlu0 %2126
  %2128 = vrot.lane.b32.xlu0 %v1526, 109
  %v2129 = vpop.permute.xlu0 %2128
  %vm2130 = vcmask 891904
  %v2131 = vsel %vm2130, %v2119, %v2121
  %v2132 = vsel %vm2130, %v2121, %v2123
  %v2133 = vsel %vm2130, %v2123, %v2125
  %v2134 = vsel %vm2130, %v2125, %v2127
  %v2135 = vsel %vm2130, %v2127, %v2129
  %v2143 = vsel %vm78, %v2117, 0
  %2145 = vmatpush.msra.mxu0 0.0
  %2146 = vmatpush.msra.mxu0 0.0
  %2147 = vmatpush.msra.mxu0 0.0
  %2148 = vmatpush.msra.mxu0 0.0
  %2149 = vmatpush.msra.mxu0 0.0
  %2150 = vmatpush.msra.mxu0 0.0
  %2151 = vmatpush.msra.mxu0 0.0
  %2152 = vmatpush.msra.mxu0 0.0
  %2153 = vmatpush.msra.mxu0 0.0
  %2154 = vmatpush.msra.mxu0 0.0
  %2155 = vmatpush.msra.mxu0 0.0
  %2156 = vmatpush.msra.mxu0 0.0
  %2157 = vmatpush.msra.mxu0 0.0
  %2158 = vmatpush.msra.mxu0 0.0
  %2159 = vmatpush.msra.mxu0 0.0
  %2160 = vmatpush.msra.mxu0 %v2131
  %2161 = vmatmul.f32.gmra.mxu0 %v2143
  %v2162 = vpop.f32.mrf.mxu0
  %v2163 = vadd.f32 0.0, %v2162
  %2164 = vdwg.mxu0
  %2165 = vmatpush.msra.mxu0 0.0
  %2166 = vmatpush.msra.mxu0 0.0
  %2167 = vmatpush.msra.mxu0 0.0
  %2168 = vmatpush.msra.mxu0 0.0
  %2169 = vmatpush.msra.mxu0 0.0
  %2170 = vmatpush.msra.mxu0 0.0
  %2171 = vmatpush.msra.mxu0 0.0
  %2172 = vmatpush.msra.mxu0 0.0
  %2173 = vmatpush.msra.mxu0 0.0
  %2174 = vmatpush.msra.mxu0 0.0
  %2175 = vmatpush.msra.mxu0 0.0
  %2176 = vmatpush.msra.mxu0 0.0
  %2177 = vmatpush.msra.mxu0 0.0
  %2178 = vmatpush.msra.mxu0 0.0
  %2179 = vmatpush.msra.mxu0 0.0
  %2180 = vmatpush.msra.mxu0 %v2132
  %2181 = vmatmul.f32.gmra.mxu0 %v2143
  %v2182 = vpop.f32.mrf.mxu0
  %v2183 = vadd.f32 0.0, %v2182
  %2184 = vdwg.mxu0
  %2185 = vmatpush.msra.mxu0 0.0
  %2186 = vmatpush.msra.mxu0 0.0
  %2187 = vmatpush.msra.mxu0 0.0
  %2188 = vmatpush.msra.mxu0 0.0
  %2189 = vmatpush.msra.mxu0 0.0
  %2190 = vmatpush.msra.mxu0 0.0
  %2191 = vmatpush.msra.mxu0 0.0
  %2192 = vmatpush.msra.mxu0 0.0
  %2193 = vmatpush.msra.mxu0 0.0
  %2194 = vmatpush.msra.mxu0 0.0
  %2195 = vmatpush.msra.mxu0 0.0
  %2196 = vmatpush.msra.mxu0 0.0
  %2197 = vmatpush.msra.mxu0 0.0
  %2198 = vmatpush.msra.mxu0 0.0
  %2199 = vmatpush.msra.mxu0 0.0
  %2200 = vmatpush.msra.mxu0 %v2133
  %2201 = vmatmul.f32.gmra.mxu0 %v2143
  %v2202 = vpop.f32.mrf.mxu0
  %v2203 = vadd.f32 0.0, %v2202
  %2204 = vdwg.mxu0
  %2205 = vmatpush.msra.mxu0 0.0
  %2206 = vmatpush.msra.mxu0 0.0
  %2207 = vmatpush.msra.mxu0 0.0
  %2208 = vmatpush.msra.mxu0 0.0
  %2209 = vmatpush.msra.mxu0 0.0
  %2210 = vmatpush.msra.mxu0 0.0
  %2211 = vmatpush.msra.mxu0 0.0
  %2212 = vmatpush.msra.mxu0 0.0
  %2213 = vmatpush.msra.mxu0 0.0
  %2214 = vmatpush.msra.mxu0 0.0
  %2215 = vmatpush.msra.mxu0 0.0
  %2216 = vmatpush.msra.mxu0 0.0
  %2217 = vmatpush.msra.mxu0 0.0
  %2218 = vmatpush.msra.mxu0 0.0
  %2219 = vmatpush.msra.mxu0 0.0
  %2220 = vmatpush.msra.mxu0 %v2134
  %2221 = vmatmul.f32.gmra.mxu0 %v2143
  %v2222 = vpop.f32.mrf.mxu0
  %v2223 = vadd.f32 0.0, %v2222
  %2224 = vdwg.mxu0
  %2225 = vmatpush.msra.mxu0 0.0
  %2226 = vmatpush.msra.mxu0 0.0
  %2227 = vmatpush.msra.mxu0 0.0
  %2228 = vmatpush.msra.mxu0 0.0
  %2229 = vmatpush.msra.mxu0 0.0
  %2230 = vmatpush.msra.mxu0 0.0
  %2231 = vmatpush.msra.mxu0 0.0
  %2232 = vmatpush.msra.mxu0 0.0
  %2233 = vmatpush.msra.mxu0 0.0
  %2234 = vmatpush.msra.mxu0 0.0
  %2235 = vmatpush.msra.mxu0 0.0
  %2236 = vmatpush.msra.mxu0 0.0
  %2237 = vmatpush.msra.mxu0 0.0
  %2238 = vmatpush.msra.mxu0 0.0
  %2239 = vmatpush.msra.mxu0 0.0
  %2240 = vmatpush.msra.mxu0 %v2135
  %2241 = vmatmul.f32.gmra.mxu0 %v2143
  %v2242 = vpop.f32.mrf.mxu0
  %v2243 = vadd.f32 0.0, %v2242
  %2244 = vdwg.mxu0
  %2245 = vmatpush.msra.mxu0 0.0
  %2246 = vmatpush.msra.mxu0 0.0
  %2247 = vmatpush.msra.mxu0 0.0
  %2248 = vmatpush.msra.mxu0 0.0
  %2249 = vmatpush.msra.mxu0 0.0
  %2250 = vmatpush.msra.mxu0 0.0
  %2251 = vmatpush.msra.mxu0 0.0
  %2252 = vmatpush.msra.mxu0 0.0
  %2253 = vmatpush.msra.mxu0 0.0
  %2254 = vmatpush.msra.mxu0 0.0
  %2255 = vmatpush.msra.mxu0 0.0
  %2256 = vmatpush.msra.mxu0 0.0
  %2257 = vmatpush.msra.mxu0 0.0
  %2258 = vmatpush.msra.mxu0 0.0
  %2259 = vmatpush.msra.mxu0 0.0
  %2260 = vmatpush.msra.mxu0 %v2129
  %2261 = vmatmul.f32.gmra.mxu0 %v2143
  %v2262 = vpop.f32.mrf.mxu0
  %v2263 = vadd.f32 0.0, %v2262
  %2264 = vdwg.mxu0
  %v2265 = vadd.f32 %v2110, %v2163
  %v2266 = vadd.f32 %v2111, %v2183
  %v2267 = vadd.f32 %v2112, %v2203
  %v2268 = vadd.f32 %v2113, %v2223
  %v2269 = vadd.f32 %v2114, %v2243
  %v2270 = vadd.f32 %v2115, %v2263
  %s2271 = scalar_lea.vmem %s4, 40
  %v2272 = vld [vmem:[%s2271] sm:$0xff]
  %2273 = vrot.lane.b32.xlu0 %v1521, 108
  %v2274 = vpop.permute.xlu0 %2273
  %2275 = vrot.lane.b32.xlu0 %v1522, 108
  %v2276 = vpop.permute.xlu0 %2275
  %2277 = vrot.lane.b32.xlu0 %v1523, 108
  %v2278 = vpop.permute.xlu0 %2277
  %2279 = vrot.lane.b32.xlu0 %v1524, 108
  %v2280 = vpop.permute.xlu0 %2279
  %2281 = vrot.lane.b32.xlu0 %v1525, 108
  %v2282 = vpop.permute.xlu0 %2281
  %2283 = vrot.lane.b32.xlu0 %v1526, 108
  %v2284 = vpop.permute.xlu0 %2283
  %vm2285 = vcmask 883712
  %v2286 = vsel %vm2285, %v2274, %v2276
  %v2287 = vsel %vm2285, %v2276, %v2278
  %v2288 = vsel %vm2285, %v2278, %v2280
  %v2289 = vsel %vm2285, %v2280, %v2282
  %v2290 = vsel %vm2285, %v2282, %v2284
  %v2298 = vsel %vm78, %v2272, 0
  %2300 = vmatpush.msra.mxu0 0.0
  %2301 = vmatpush.msra.mxu0 0.0
  %2302 = vmatpush.msra.mxu0 0.0
  %2303 = vmatpush.msra.mxu0 0.0
  %2304 = vmatpush.msra.mxu0 0.0
  %2305 = vmatpush.msra.mxu0 0.0
  %2306 = vmatpush.msra.mxu0 0.0
  %2307 = vmatpush.msra.mxu0 0.0
  %2308 = vmatpush.msra.mxu0 0.0
  %2309 = vmatpush.msra.mxu0 0.0
  %2310 = vmatpush.msra.mxu0 0.0
  %2311 = vmatpush.msra.mxu0 0.0
  %2312 = vmatpush.msra.mxu0 0.0
  %2313 = vmatpush.msra.mxu0 0.0
  %2314 = vmatpush.msra.mxu0 0.0
  %2315 = vmatpush.msra.mxu0 %v2286
  %2316 = vmatmul.f32.gmra.mxu0 %v2298
  %v2317 = vpop.f32.mrf.mxu0
  %v2318 = vadd.f32 0.0, %v2317
  %2319 = vdwg.mxu0
  %2320 = vmatpush.msra.mxu0 0.0
  %2321 = vmatpush.msra.mxu0 0.0
  %2322 = vmatpush.msra.mxu0 0.0
  %2323 = vmatpush.msra.mxu0 0.0
  %2324 = vmatpush.msra.mxu0 0.0
  %2325 = vmatpush.msra.mxu0 0.0
  %2326 = vmatpush.msra.mxu0 0.0
  %2327 = vmatpush.msra.mxu0 0.0
  %2328 = vmatpush.msra.mxu0 0.0
  %2329 = vmatpush.msra.mxu0 0.0
  %2330 = vmatpush.msra.mxu0 0.0
  %2331 = vmatpush.msra.mxu0 0.0
  %2332 = vmatpush.msra.mxu0 0.0
  %2333 = vmatpush.msra.mxu0 0.0
  %2334 = vmatpush.msra.mxu0 0.0
  %2335 = vmatpush.msra.mxu0 %v2287
  %2336 = vmatmul.f32.gmra.mxu0 %v2298
  %v2337 = vpop.f32.mrf.mxu0
  %v2338 = vadd.f32 0.0, %v2337
  %2339 = vdwg.mxu0
  %2340 = vmatpush.msra.mxu0 0.0
  %2341 = vmatpush.msra.mxu0 0.0
  %2342 = vmatpush.msra.mxu0 0.0
  %2343 = vmatpush.msra.mxu0 0.0
  %2344 = vmatpush.msra.mxu0 0.0
  %2345 = vmatpush.msra.mxu0 0.0
  %2346 = vmatpush.msra.mxu0 0.0
  %2347 = vmatpush.msra.mxu0 0.0
  %2348 = vmatpush.msra.mxu0 0.0
  %2349 = vmatpush.msra.mxu0 0.0
  %2350 = vmatpush.msra.mxu0 0.0
  %2351 = vmatpush.msra.mxu0 0.0
  %2352 = vmatpush.msra.mxu0 0.0
  %2353 = vmatpush.msra.mxu0 0.0
  %2354 = vmatpush.msra.mxu0 0.0
  %2355 = vmatpush.msra.mxu0 %v2288
  %2356 = vmatmul.f32.gmra.mxu0 %v2298
  %v2357 = vpop.f32.mrf.mxu0
  %v2358 = vadd.f32 0.0, %v2357
  %2359 = vdwg.mxu0
  %2360 = vmatpush.msra.mxu0 0.0
  %2361 = vmatpush.msra.mxu0 0.0
  %2362 = vmatpush.msra.mxu0 0.0
  %2363 = vmatpush.msra.mxu0 0.0
  %2364 = vmatpush.msra.mxu0 0.0
  %2365 = vmatpush.msra.mxu0 0.0
  %2366 = vmatpush.msra.mxu0 0.0
  %2367 = vmatpush.msra.mxu0 0.0
  %2368 = vmatpush.msra.mxu0 0.0
  %2369 = vmatpush.msra.mxu0 0.0
  %2370 = vmatpush.msra.mxu0 0.0
  %2371 = vmatpush.msra.mxu0 0.0
  %2372 = vmatpush.msra.mxu0 0.0
  %2373 = vmatpush.msra.mxu0 0.0
  %2374 = vmatpush.msra.mxu0 0.0
  %2375 = vmatpush.msra.mxu0 %v2289
  %2376 = vmatmul.f32.gmra.mxu0 %v2298
  %v2377 = vpop.f32.mrf.mxu0
  %v2378 = vadd.f32 0.0, %v2377
  %2379 = vdwg.mxu0
  %2380 = vmatpush.msra.mxu0 0.0
  %2381 = vmatpush.msra.mxu0 0.0
  %2382 = vmatpush.msra.mxu0 0.0
  %2383 = vmatpush.msra.mxu0 0.0
  %2384 = vmatpush.msra.mxu0 0.0
  %2385 = vmatpush.msra.mxu0 0.0
  %2386 = vmatpush.msra.mxu0 0.0
  %2387 = vmatpush.msra.mxu0 0.0
  %2388 = vmatpush.msra.mxu0 0.0
  %2389 = vmatpush.msra.mxu0 0.0
  %2390 = vmatpush.msra.mxu0 0.0
  %2391 = vmatpush.msra.mxu0 0.0
  %2392 = vmatpush.msra.mxu0 0.0
  %2393 = vmatpush.msra.mxu0 0.0
  %2394 = vmatpush.msra.mxu0 0.0
  %2395 = vmatpush.msra.mxu0 %v2290
  %2396 = vmatmul.f32.gmra.mxu0 %v2298
  %v2397 = vpop.f32.mrf.mxu0
  %v2398 = vadd.f32 0.0, %v2397
  %2399 = vdwg.mxu0
  %2400 = vmatpush.msra.mxu0 0.0
  %2401 = vmatpush.msra.mxu0 0.0
  %2402 = vmatpush.msra.mxu0 0.0
  %2403 = vmatpush.msra.mxu0 0.0
  %2404 = vmatpush.msra.mxu0 0.0
  %2405 = vmatpush.msra.mxu0 0.0
  %2406 = vmatpush.msra.mxu0 0.0
  %2407 = vmatpush.msra.mxu0 0.0
  %2408 = vmatpush.msra.mxu0 0.0
  %2409 = vmatpush.msra.mxu0 0.0
  %2410 = vmatpush.msra.mxu0 0.0
  %2411 = vmatpush.msra.mxu0 0.0
  %2412 = vmatpush.msra.mxu0 0.0
  %2413 = vmatpush.msra.mxu0 0.0
  %2414 = vmatpush.msra.mxu0 0.0
  %2415 = vmatpush.msra.mxu0 %v2284
  %2416 = vmatmul.f32.gmra.mxu0 %v2298
  %v2417 = vpop.f32.mrf.mxu0
  %v2418 = vadd.f32 0.0, %v2417
  %2419 = vdwg.mxu0
  %v2420 = vadd.f32 %v2265, %v2318
  %v2421 = vadd.f32 %v2266, %v2338
  %v2422 = vadd.f32 %v2267, %v2358
  %v2423 = vadd.f32 %v2268, %v2378
  %v2424 = vadd.f32 %v2269, %v2398
  %v2425 = vadd.f32 %v2270, %v2418
  %s2426 = scalar_lea.vmem %s4, 48
  %v2427 = vld [vmem:[%s2426] sm:$0xff]
  %2428 = vrot.lane.b32.xlu0 %v1521, 92
  %v2429 = vpop.permute.xlu0 %2428
  %2430 = vrot.lane.b32.xlu0 %v1522, 92
  %v2431 = vpop.permute.xlu0 %2430
  %2432 = vrot.lane.b32.xlu0 %v1523, 92
  %v2433 = vpop.permute.xlu0 %2432
  %2434 = vrot.lane.b32.xlu0 %v1524, 92
  %v2435 = vpop.permute.xlu0 %2434
  %2436 = vrot.lane.b32.xlu0 %v1525, 92
  %v2437 = vpop.permute.xlu0 %2436
  %2438 = vrot.lane.b32.xlu0 %v1526, 92
  %v2439 = vpop.permute.xlu0 %2438
  %vm2440 = vcmask 752640
  %v2441 = vsel %vm2440, %v2429, %v2431
  %v2442 = vsel %vm2440, %v2431, %v2433
  %v2443 = vsel %vm2440, %v2433, %v2435
  %v2444 = vsel %vm2440, %v2435, %v2437
  %v2445 = vsel %vm2440, %v2437, %v2439
  %v2453 = vsel %vm78, %v2427, 0
  %2455 = vmatpush.msra.mxu0 0.0
  %2456 = vmatpush.msra.mxu0 0.0
  %2457 = vmatpush.msra.mxu0 0.0
  %2458 = vmatpush.msra.mxu0 0.0
  %2459 = vmatpush.msra.mxu0 0.0
  %2460 = vmatpush.msra.mxu0 0.0
  %2461 = vmatpush.msra.mxu0 0.0
  %2462 = vmatpush.msra.mxu0 0.0
  %2463 = vmatpush.msra.mxu0 0.0
  %2464 = vmatpush.msra.mxu0 0.0
  %2465 = vmatpush.msra.mxu0 0.0
  %2466 = vmatpush.msra.mxu0 0.0
  %2467 = vmatpush.msra.mxu0 0.0
  %2468 = vmatpush.msra.mxu0 0.0
  %2469 = vmatpush.msra.mxu0 0.0
  %2470 = vmatpush.msra.mxu0 %v2441
  %2471 = vmatmul.f32.gmra.mxu0 %v2453
  %v2472 = vpop.f32.mrf.mxu0
  %v2473 = vadd.f32 0.0, %v2472
  %2474 = vdwg.mxu0
  %2475 = vmatpush.msra.mxu0 0.0
  %2476 = vmatpush.msra.mxu0 0.0
  %2477 = vmatpush.msra.mxu0 0.0
  %2478 = vmatpush.msra.mxu0 0.0
  %2479 = vmatpush.msra.mxu0 0.0
  %2480 = vmatpush.msra.mxu0 0.0
  %2481 = vmatpush.msra.mxu0 0.0
  %2482 = vmatpush.msra.mxu0 0.0
  %2483 = vmatpush.msra.mxu0 0.0
  %2484 = vmatpush.msra.mxu0 0.0
  %2485 = vmatpush.msra.mxu0 0.0
  %2486 = vmatpush.msra.mxu0 0.0
  %2487 = vmatpush.msra.mxu0 0.0
  %2488 = vmatpush.msra.mxu0 0.0
  %2489 = vmatpush.msra.mxu0 0.0
  %2490 = vmatpush.msra.mxu0 %v2442
  %2491 = vmatmul.f32.gmra.mxu0 %v2453
  %v2492 = vpop.f32.mrf.mxu0
  %v2493 = vadd.f32 0.0, %v2492
  %2494 = vdwg.mxu0
  %2495 = vmatpush.msra.mxu0 0.0
  %2496 = vmatpush.msra.mxu0 0.0
  %2497 = vmatpush.msra.mxu0 0.0
  %2498 = vmatpush.msra.mxu0 0.0
  %2499 = vmatpush.msra.mxu0 0.0
  %2500 = vmatpush.msra.mxu0 0.0
  %2501 = vmatpush.msra.mxu0 0.0
  %2502 = vmatpush.msra.mxu0 0.0
  %2503 = vmatpush.msra.mxu0 0.0
  %2504 = vmatpush.msra.mxu0 0.0
  %2505 = vmatpush.msra.mxu0 0.0
  %2506 = vmatpush.msra.mxu0 0.0
  %2507 = vmatpush.msra.mxu0 0.0
  %2508 = vmatpush.msra.mxu0 0.0
  %2509 = vmatpush.msra.mxu0 0.0
  %2510 = vmatpush.msra.mxu0 %v2443
  %2511 = vmatmul.f32.gmra.mxu0 %v2453
  %v2512 = vpop.f32.mrf.mxu0
  %v2513 = vadd.f32 0.0, %v2512
  %2514 = vdwg.mxu0
  %2515 = vmatpush.msra.mxu0 0.0
  %2516 = vmatpush.msra.mxu0 0.0
  %2517 = vmatpush.msra.mxu0 0.0
  %2518 = vmatpush.msra.mxu0 0.0
  %2519 = vmatpush.msra.mxu0 0.0
  %2520 = vmatpush.msra.mxu0 0.0
  %2521 = vmatpush.msra.mxu0 0.0
  %2522 = vmatpush.msra.mxu0 0.0
  %2523 = vmatpush.msra.mxu0 0.0
  %2524 = vmatpush.msra.mxu0 0.0
  %2525 = vmatpush.msra.mxu0 0.0
  %2526 = vmatpush.msra.mxu0 0.0
  %2527 = vmatpush.msra.mxu0 0.0
  %2528 = vmatpush.msra.mxu0 0.0
  %2529 = vmatpush.msra.mxu0 0.0
  %2530 = vmatpush.msra.mxu0 %v2444
  %2531 = vmatmul.f32.gmra.mxu0 %v2453
  %v2532 = vpop.f32.mrf.mxu0
  %v2533 = vadd.f32 0.0, %v2532
  %2534 = vdwg.mxu0
  %2535 = vmatpush.msra.mxu0 0.0
  %2536 = vmatpush.msra.mxu0 0.0
  %2537 = vmatpush.msra.mxu0 0.0
  %2538 = vmatpush.msra.mxu0 0.0
  %2539 = vmatpush.msra.mxu0 0.0
  %2540 = vmatpush.msra.mxu0 0.0
  %2541 = vmatpush.msra.mxu0 0.0
  %2542 = vmatpush.msra.mxu0 0.0
  %2543 = vmatpush.msra.mxu0 0.0
  %2544 = vmatpush.msra.mxu0 0.0
  %2545 = vmatpush.msra.mxu0 0.0
  %2546 = vmatpush.msra.mxu0 0.0
  %2547 = vmatpush.msra.mxu0 0.0
  %2548 = vmatpush.msra.mxu0 0.0
  %2549 = vmatpush.msra.mxu0 0.0
  %2550 = vmatpush.msra.mxu0 %v2445
  %2551 = vmatmul.f32.gmra.mxu0 %v2453
  %v2552 = vpop.f32.mrf.mxu0
  %v2553 = vadd.f32 0.0, %v2552
  %2554 = vdwg.mxu0
  %2555 = vmatpush.msra.mxu0 0.0
  %2556 = vmatpush.msra.mxu0 0.0
  %2557 = vmatpush.msra.mxu0 0.0
  %2558 = vmatpush.msra.mxu0 0.0
  %2559 = vmatpush.msra.mxu0 0.0
  %2560 = vmatpush.msra.mxu0 0.0
  %2561 = vmatpush.msra.mxu0 0.0
  %2562 = vmatpush.msra.mxu0 0.0
  %2563 = vmatpush.msra.mxu0 0.0
  %2564 = vmatpush.msra.mxu0 0.0
  %2565 = vmatpush.msra.mxu0 0.0
  %2566 = vmatpush.msra.mxu0 0.0
  %2567 = vmatpush.msra.mxu0 0.0
  %2568 = vmatpush.msra.mxu0 0.0
  %2569 = vmatpush.msra.mxu0 0.0
  %2570 = vmatpush.msra.mxu0 %v2439
  %2571 = vmatmul.f32.gmra.mxu0 %v2453
  %v2572 = vpop.f32.mrf.mxu0
  %v2573 = vadd.f32 0.0, %v2572
  %2574 = vdwg.mxu0
  %v2575 = vadd.f32 %v2420, %v2473
  %v2576 = vadd.f32 %v2421, %v2493
  %v2577 = vadd.f32 %v2422, %v2513
  %v2578 = vadd.f32 %v2423, %v2533
  %v2579 = vadd.f32 %v2424, %v2553
  %v2580 = vadd.f32 %v2425, %v2573
  %s2581 = scalar_lea.vmem %s4, 56
  %v2582 = vld [vmem:[%s2581] sm:$0xff]
  %2583 = vrot.lane.b32.xlu0 %v1521, 91
  %v2584 = vpop.permute.xlu0 %2583
  %2585 = vrot.lane.b32.xlu0 %v1522, 91
  %v2586 = vpop.permute.xlu0 %2585
  %2587 = vrot.lane.b32.xlu0 %v1523, 91
  %v2588 = vpop.permute.xlu0 %2587
  %2589 = vrot.lane.b32.xlu0 %v1524, 91
  %v2590 = vpop.permute.xlu0 %2589
  %2591 = vrot.lane.b32.xlu0 %v1525, 91
  %v2592 = vpop.permute.xlu0 %2591
  %2593 = vrot.lane.b32.xlu0 %v1526, 91
  %v2594 = vpop.permute.xlu0 %2593
  %vm2595 = vcmask 744448
  %v2596 = vsel %vm2595, %v2584, %v2586
  %v2597 = vsel %vm2595, %v2586, %v2588
  %v2598 = vsel %vm2595, %v2588, %v2590
  %v2599 = vsel %vm2595, %v2590, %v2592
  %v2600 = vsel %vm2595, %v2592, %v2594
  %v2608 = vsel %vm78, %v2582, 0
  %2610 = vmatpush.msra.mxu0 0.0
  %2611 = vmatpush.msra.mxu0 0.0
  %2612 = vmatpush.msra.mxu0 0.0
  %2613 = vmatpush.msra.mxu0 0.0
  %2614 = vmatpush.msra.mxu0 0.0
  %2615 = vmatpush.msra.mxu0 0.0
  %2616 = vmatpush.msra.mxu0 0.0
  %2617 = vmatpush.msra.mxu0 0.0
  %2618 = vmatpush.msra.mxu0 0.0
  %2619 = vmatpush.msra.mxu0 0.0
  %2620 = vmatpush.msra.mxu0 0.0
  %2621 = vmatpush.msra.mxu0 0.0
  %2622 = vmatpush.msra.mxu0 0.0
  %2623 = vmatpush.msra.mxu0 0.0
  %2624 = vmatpush.msra.mxu0 0.0
  %2625 = vmatpush.msra.mxu0 %v2596
  %2626 = vmatmul.f32.gmra.mxu0 %v2608
  %v2627 = vpop.f32.mrf.mxu0
  %v2628 = vadd.f32 0.0, %v2627
  %2629 = vdwg.mxu0
  %2630 = vmatpush.msra.mxu0 0.0
  %2631 = vmatpush.msra.mxu0 0.0
  %2632 = vmatpush.msra.mxu0 0.0
  %2633 = vmatpush.msra.mxu0 0.0
  %2634 = vmatpush.msra.mxu0 0.0
  %2635 = vmatpush.msra.mxu0 0.0
  %2636 = vmatpush.msra.mxu0 0.0
  %2637 = vmatpush.msra.mxu0 0.0
  %2638 = vmatpush.msra.mxu0 0.0
  %2639 = vmatpush.msra.mxu0 0.0
  %2640 = vmatpush.msra.mxu0 0.0
  %2641 = vmatpush.msra.mxu0 0.0
  %2642 = vmatpush.msra.mxu0 0.0
  %2643 = vmatpush.msra.mxu0 0.0
  %2644 = vmatpush.msra.mxu0 0.0
  %2645 = vmatpush.msra.mxu0 %v2597
  %2646 = vmatmul.f32.gmra.mxu0 %v2608
  %v2647 = vpop.f32.mrf.mxu0
  %v2648 = vadd.f32 0.0, %v2647
  %2649 = vdwg.mxu0
  %2650 = vmatpush.msra.mxu0 0.0
  %2651 = vmatpush.msra.mxu0 0.0
  %2652 = vmatpush.msra.mxu0 0.0
  %2653 = vmatpush.msra.mxu0 0.0
  %2654 = vmatpush.msra.mxu0 0.0
  %2655 = vmatpush.msra.mxu0 0.0
  %2656 = vmatpush.msra.mxu0 0.0
  %2657 = vmatpush.msra.mxu0 0.0
  %2658 = vmatpush.msra.mxu0 0.0
  %2659 = vmatpush.msra.mxu0 0.0
  %2660 = vmatpush.msra.mxu0 0.0
  %2661 = vmatpush.msra.mxu0 0.0
  %2662 = vmatpush.msra.mxu0 0.0
  %2663 = vmatpush.msra.mxu0 0.0
  %2664 = vmatpush.msra.mxu0 0.0
  %2665 = vmatpush.msra.mxu0 %v2598
  %2666 = vmatmul.f32.gmra.mxu0 %v2608
  %v2667 = vpop.f32.mrf.mxu0
  %v2668 = vadd.f32 0.0, %v2667
  %2669 = vdwg.mxu0
  %2670 = vmatpush.msra.mxu0 0.0
  %2671 = vmatpush.msra.mxu0 0.0
  %2672 = vmatpush.msra.mxu0 0.0
  %2673 = vmatpush.msra.mxu0 0.0
  %2674 = vmatpush.msra.mxu0 0.0
  %2675 = vmatpush.msra.mxu0 0.0
  %2676 = vmatpush.msra.mxu0 0.0
  %2677 = vmatpush.msra.mxu0 0.0
  %2678 = vmatpush.msra.mxu0 0.0
  %2679 = vmatpush.msra.mxu0 0.0
  %2680 = vmatpush.msra.mxu0 0.0
  %2681 = vmatpush.msra.mxu0 0.0
  %2682 = vmatpush.msra.mxu0 0.0
  %2683 = vmatpush.msra.mxu0 0.0
  %2684 = vmatpush.msra.mxu0 0.0
  %2685 = vmatpush.msra.mxu0 %v2599
  %2686 = vmatmul.f32.gmra.mxu0 %v2608
  %v2687 = vpop.f32.mrf.mxu0
  %v2688 = vadd.f32 0.0, %v2687
  %2689 = vdwg.mxu0
  %2690 = vmatpush.msra.mxu0 0.0
  %2691 = vmatpush.msra.mxu0 0.0
  %2692 = vmatpush.msra.mxu0 0.0
  %2693 = vmatpush.msra.mxu0 0.0
  %2694 = vmatpush.msra.mxu0 0.0
  %2695 = vmatpush.msra.mxu0 0.0
  %2696 = vmatpush.msra.mxu0 0.0
  %2697 = vmatpush.msra.mxu0 0.0
  %2698 = vmatpush.msra.mxu0 0.0
  %2699 = vmatpush.msra.mxu0 0.0
  %2700 = vmatpush.msra.mxu0 0.0
  %2701 = vmatpush.msra.mxu0 0.0
  %2702 = vmatpush.msra.mxu0 0.0
  %2703 = vmatpush.msra.mxu0 0.0
  %2704 = vmatpush.msra.mxu0 0.0
  %2705 = vmatpush.msra.mxu0 %v2600
  %2706 = vmatmul.f32.gmra.mxu0 %v2608
  %v2707 = vpop.f32.mrf.mxu0
  %v2708 = vadd.f32 0.0, %v2707
  %2709 = vdwg.mxu0
  %2710 = vmatpush.msra.mxu0 0.0
  %2711 = vmatpush.msra.mxu0 0.0
  %2712 = vmatpush.msra.mxu0 0.0
  %2713 = vmatpush.msra.mxu0 0.0
  %2714 = vmatpush.msra.mxu0 0.0
  %2715 = vmatpush.msra.mxu0 0.0
  %2716 = vmatpush.msra.mxu0 0.0
  %2717 = vmatpush.msra.mxu0 0.0
  %2718 = vmatpush.msra.mxu0 0.0
  %2719 = vmatpush.msra.mxu0 0.0
  %2720 = vmatpush.msra.mxu0 0.0
  %2721 = vmatpush.msra.mxu0 0.0
  %2722 = vmatpush.msra.mxu0 0.0
  %2723 = vmatpush.msra.mxu0 0.0
  %2724 = vmatpush.msra.mxu0 0.0
  %2725 = vmatpush.msra.mxu0 %v2594
  %2726 = vmatmul.f32.gmra.mxu0 %v2608
  %v2727 = vpop.f32.mrf.mxu0
  %v2728 = vadd.f32 0.0, %v2727
  %2729 = vdwg.mxu0
  %v2730 = vadd.f32 %v2575, %v2628
  %v2731 = vadd.f32 %v2576, %v2648
  %v2732 = vadd.f32 %v2577, %v2668
  %v2733 = vadd.f32 %v2578, %v2688
  %v2734 = vadd.f32 %v2579, %v2708
  %v2735 = vadd.f32 %v2580, %v2728
  %s2736 = scalar_lea.vmem %s4, 64
  %v2737 = vld [vmem:[%s2736] sm:$0xff]
  %2738 = vrot.lane.b32.xlu0 %v1521, 90
  %v2739 = vpop.permute.xlu0 %2738
  %2740 = vrot.lane.b32.xlu0 %v1522, 90
  %v2741 = vpop.permute.xlu0 %2740
  %2742 = vrot.lane.b32.xlu0 %v1523, 90
  %v2743 = vpop.permute.xlu0 %2742
  %2744 = vrot.lane.b32.xlu0 %v1524, 90
  %v2745 = vpop.permute.xlu0 %2744
  %2746 = vrot.lane.b32.xlu0 %v1525, 90
  %v2747 = vpop.permute.xlu0 %2746
  %2748 = vrot.lane.b32.xlu0 %v1526, 90
  %v2749 = vpop.permute.xlu0 %2748
  %vm2750 = vcmask 736256
  %v2751 = vsel %vm2750, %v2739, %v2741
  %v2752 = vsel %vm2750, %v2741, %v2743
  %v2753 = vsel %vm2750, %v2743, %v2745
  %v2754 = vsel %vm2750, %v2745, %v2747
  %v2755 = vsel %vm2750, %v2747, %v2749
  %v2763 = vsel %vm78, %v2737, 0
  %2765 = vmatpush.msra.mxu0 0.0
  %2766 = vmatpush.msra.mxu0 0.0
  %2767 = vmatpush.msra.mxu0 0.0
  %2768 = vmatpush.msra.mxu0 0.0
  %2769 = vmatpush.msra.mxu0 0.0
  %2770 = vmatpush.msra.mxu0 0.0
  %2771 = vmatpush.msra.mxu0 0.0
  %2772 = vmatpush.msra.mxu0 0.0
  %2773 = vmatpush.msra.mxu0 0.0
  %2774 = vmatpush.msra.mxu0 0.0
  %2775 = vmatpush.msra.mxu0 0.0
  %2776 = vmatpush.msra.mxu0 0.0
  %2777 = vmatpush.msra.mxu0 0.0
  %2778 = vmatpush.msra.mxu0 0.0
  %2779 = vmatpush.msra.mxu0 0.0
  %2780 = vmatpush.msra.mxu0 %v2751
  %2781 = vmatmul.f32.gmra.mxu0 %v2763
  %v2782 = vpop.f32.mrf.mxu0
  %v2783 = vadd.f32 0.0, %v2782
  %2784 = vdwg.mxu0
  %2785 = vmatpush.msra.mxu0 0.0
  %2786 = vmatpush.msra.mxu0 0.0
  %2787 = vmatpush.msra.mxu0 0.0
  %2788 = vmatpush.msra.mxu0 0.0
  %2789 = vmatpush.msra.mxu0 0.0
  %2790 = vmatpush.msra.mxu0 0.0
  %2791 = vmatpush.msra.mxu0 0.0
  %2792 = vmatpush.msra.mxu0 0.0
  %2793 = vmatpush.msra.mxu0 0.0
  %2794 = vmatpush.msra.mxu0 0.0
  %2795 = vmatpush.msra.mxu0 0.0
  %2796 = vmatpush.msra.mxu0 0.0
  %2797 = vmatpush.msra.mxu0 0.0
  %2798 = vmatpush.msra.mxu0 0.0
  %2799 = vmatpush.msra.mxu0 0.0
  %2800 = vmatpush.msra.mxu0 %v2752
  %2801 = vmatmul.f32.gmra.mxu0 %v2763
  %v2802 = vpop.f32.mrf.mxu0
  %v2803 = vadd.f32 0.0, %v2802
  %2804 = vdwg.mxu0
  %2805 = vmatpush.msra.mxu0 0.0
  %2806 = vmatpush.msra.mxu0 0.0
  %2807 = vmatpush.msra.mxu0 0.0
  %2808 = vmatpush.msra.mxu0 0.0
  %2809 = vmatpush.msra.mxu0 0.0
  %2810 = vmatpush.msra.mxu0 0.0
  %2811 = vmatpush.msra.mxu0 0.0
  %2812 = vmatpush.msra.mxu0 0.0
  %2813 = vmatpush.msra.mxu0 0.0
  %2814 = vmatpush.msra.mxu0 0.0
  %2815 = vmatpush.msra.mxu0 0.0
  %2816 = vmatpush.msra.mxu0 0.0
  %2817 = vmatpush.msra.mxu0 0.0
  %2818 = vmatpush.msra.mxu0 0.0
  %2819 = vmatpush.msra.mxu0 0.0
  %2820 = vmatpush.msra.mxu0 %v2753
  %2821 = vmatmul.f32.gmra.mxu0 %v2763
  %v2822 = vpop.f32.mrf.mxu0
  %v2823 = vadd.f32 0.0, %v2822
  %2824 = vdwg.mxu0
  %2825 = vmatpush.msra.mxu0 0.0
  %2826 = vmatpush.msra.mxu0 0.0
  %2827 = vmatpush.msra.mxu0 0.0
  %2828 = vmatpush.msra.mxu0 0.0
  %2829 = vmatpush.msra.mxu0 0.0
  %2830 = vmatpush.msra.mxu0 0.0
  %2831 = vmatpush.msra.mxu0 0.0
  %2832 = vmatpush.msra.mxu0 0.0
  %2833 = vmatpush.msra.mxu0 0.0
  %2834 = vmatpush.msra.mxu0 0.0
  %2835 = vmatpush.msra.mxu0 0.0
  %2836 = vmatpush.msra.mxu0 0.0
  %2837 = vmatpush.msra.mxu0 0.0
  %2838 = vmatpush.msra.mxu0 0.0
  %2839 = vmatpush.msra.mxu0 0.0
  %2840 = vmatpush.msra.mxu0 %v2754
  %2841 = vmatmul.f32.gmra.mxu0 %v2763
  %v2842 = vpop.f32.mrf.mxu0
  %v2843 = vadd.f32 0.0, %v2842
  %2844 = vdwg.mxu0
  %2845 = vmatpush.msra.mxu0 0.0
  %2846 = vmatpush.msra.mxu0 0.0
  %2847 = vmatpush.msra.mxu0 0.0
  %2848 = vmatpush.msra.mxu0 0.0
  %2849 = vmatpush.msra.mxu0 0.0
  %2850 = vmatpush.msra.mxu0 0.0
  %2851 = vmatpush.msra.mxu0 0.0
  %2852 = vmatpush.msra.mxu0 0.0
  %2853 = vmatpush.msra.mxu0 0.0
  %2854 = vmatpush.msra.mxu0 0.0
  %2855 = vmatpush.msra.mxu0 0.0
  %2856 = vmatpush.msra.mxu0 0.0
  %2857 = vmatpush.msra.mxu0 0.0
  %2858 = vmatpush.msra.mxu0 0.0
  %2859 = vmatpush.msra.mxu0 0.0
  %2860 = vmatpush.msra.mxu0 %v2755
  %2861 = vmatmul.f32.gmra.mxu0 %v2763
  %v2862 = vpop.f32.mrf.mxu0
  %v2863 = vadd.f32 0.0, %v2862
  %2864 = vdwg.mxu0
  %2865 = vmatpush.msra.mxu0 0.0
  %2866 = vmatpush.msra.mxu0 0.0
  %2867 = vmatpush.msra.mxu0 0.0
  %2868 = vmatpush.msra.mxu0 0.0
  %2869 = vmatpush.msra.mxu0 0.0
  %2870 = vmatpush.msra.mxu0 0.0
  %2871 = vmatpush.msra.mxu0 0.0
  %2872 = vmatpush.msra.mxu0 0.0
  %2873 = vmatpush.msra.mxu0 0.0
  %2874 = vmatpush.msra.mxu0 0.0
  %2875 = vmatpush.msra.mxu0 0.0
  %2876 = vmatpush.msra.mxu0 0.0
  %2877 = vmatpush.msra.mxu0 0.0
  %2878 = vmatpush.msra.mxu0 0.0
  %2879 = vmatpush.msra.mxu0 0.0
  %2880 = vmatpush.msra.mxu0 %v2749
  %2881 = vmatmul.f32.gmra.mxu0 %v2763
  %v2882 = vpop.f32.mrf.mxu0
  %v2883 = vadd.f32 0.0, %v2882
  %2884 = vdwg.mxu0
  %v2885 = vadd.f32 %v2730, %v2783
  %v2886 = vadd.f32 %v2731, %v2803
  %v2887 = vadd.f32 %v2732, %v2823
  %v2888 = vadd.f32 %v2733, %v2843
  %v2889 = vadd.f32 %v2734, %v2863
  %v2890 = vadd.f32 %v2735, %v2883
  %v2892 = vperm.slane %v33, 0
  %v2893 = vperm.slane %v33, 1
  %v2894 = vperm.slane %v33, 2
  %v2895 = vperm.slane %v33, 3
  %v2896 = vperm.slane %v33, 4
  %v2897 = vperm.slane %v33, 5
  %v2904 = vmul.f32 %v2885, %v2892
  %v2905 = vmul.f32 %v2886, %v2893
  %v2906 = vmul.f32 %v2887, %v2894
  %v2907 = vmul.f32 %v2888, %v2895
  %v2908 = vmul.f32 %v2889, %v2896
  %v2909 = vmul.f32 %v2890, %v2897
  %v2910 = vadd.f32 %v2904, %v2905
  %v2911 = vadd.f32 %v2910, %v2906
  %v2912 = vadd.f32 %v2911, %v2907
  %v2913 = vadd.f32 %v2912, %v2908
  %v2914 = vsel %vm78, %v2909, 0.0
  %v2915 = vadd.f32 %v2913, %v2914
  %2916 = vadd.xlane.f32.xlu0 %v2915
  %v2917 = vpop.xlane.xlu0 %2916
  %v2918 = vmul.f32 %v2917, 0.001953125
  %v2919 = vmul.f32 %v2904, %v2885
  %v2920 = vmul.f32 %v2905, %v2886
  %v2921 = vmul.f32 %v2906, %v2887
  %v2922 = vmul.f32 %v2907, %v2888
  %v2923 = vmul.f32 %v2908, %v2889
  %v2924 = vmul.f32 %v2909, %v2890
  %v2925 = vadd.f32 %v2919, %v2920
  %v2926 = vadd.f32 %v2925, %v2921
  %v2927 = vadd.f32 %v2926, %v2922
  %v2928 = vadd.f32 %v2927, %v2923
  %v2929 = vsel %vm78, %v2924, 0.0
  %v2930 = vadd.f32 %v2928, %v2929
  %2931 = vadd.xlane.f32.xlu0 %v2930
  %v2932 = vpop.xlane.xlu0 %2931
  %v2933 = vmul.f32 %v2932, 0.001953125
  %v2934 = vmul.f32 %v2918, %v2918
  %v2935 = vsub.f32 %v2933, %v2934
  %v2936 = vld [vmem:[%s5] sm:$0xff]
  %v2937 = vadd.f32 %v2935, 1e-05
  %v2938 = vrsqrt.pop %v2937
  %v2939 = vmul.f32 %v2938, %v2937
  %v2940 = vmul.f32 %v2939, %v2938
  %v2941 = vmul.f32 0.5, %v2940
  %v2942 = vsub.f32 1.5, %v2941
  %v2943 = vmul.f32 %v2938, %v2942
  %vm2944 = vweird.f32 %v2937
  %vm2945 = vweird.f32 %v2938
  %vm2946 = vmor %vm2944, %vm2945
  %v2947 = vsel %vm2946, %v2938, %v2943
  %v2948 = vmul.f32 %v2936, %v2947
  %v2949 = vld [vmem:[%s6] sm:$0xff]
  %v2950 = vmul.f32 %v2918, %v2948
  %v2951 = vsub.f32 %v2949, %v2950
  %2953 = vset.pattern.permute.xlu0 0
  %2954 = vperm.xlu0 %2953, %v2948
  %v2955 = vpop.permute.xlu0 %2954
  %v2957 = vmul.f32 %v2885, %v2955
  %v2958 = vmul.f32 %v2886, %v2955
  %v2959 = vmul.f32 %v2887, %v2955
  %v2960 = vmul.f32 %v2888, %v2955
  %v2961 = vmul.f32 %v2889, %v2955
  %v2962 = vmul.f32 %v2890, %v2955
  %2964 = vset.pattern.permute.xlu0 0
  %2965 = vperm.xlu0 %2964, %v2951
  %v2966 = vpop.permute.xlu0 %2965
  %v2968 = vadd.f32 %v2957, %v2966
  %v2969 = vadd.f32 %v2958, %v2966
  %v2970 = vadd.f32 %v2959, %v2966
  %v2971 = vadd.f32 %v2960, %v2966
  %v2972 = vadd.f32 %v2961, %v2966
  %v2973 = vadd.f32 %v2962, %v2966
  %v2974 = vadd.f32 %v2968, %v36
  %v2975 = vadd.f32 %v2969, %v37
  %v2976 = vadd.f32 %v2970, %v38
  %v2977 = vadd.f32 %v2971, %v39
  %v2978 = vadd.f32 %v2972, %v40
  %v2979 = vadd.f32 %v2973, %v41
  %v2980 = vmax.f32 %v2974, 0.0
  %v2981 = vmax.f32 %v2975, 0.0
  %v2982 = vmax.f32 %v2976, 0.0
  %v2983 = vmax.f32 %v2977, 0.0
  %v2984 = vmax.f32 %v2978, 0.0
  %v2985 = vmax.f32 %v2979, 0.0
  %v2986 = vmul.f32 %v2980, %v2892
  %v2987 = vmul.f32 %v2981, %v2893
  %v2988 = vmul.f32 %v2982, %v2894
  %v2989 = vmul.f32 %v2983, %v2895
  %v2990 = vmul.f32 %v2984, %v2896
  %v2991 = vmul.f32 %v2985, %v2897
  %2992 = vst [vmem:[%s9] sm:$0xff] %v2986
  %2993 = vst [vmem:[%s9 + $0x8] sm:$0xff] %v2987
  %2994 = vst [vmem:[%s9 + $0x10] sm:$0xff] %v2988
  %2995 = vst [vmem:[%s9 + $0x18] sm:$0xff] %v2989
  %2996 = vst [vmem:[%s9 + $0x20] sm:$0xff] %v2990
  %2997 = vst.msk [vmem:[%s9 + $0x28] sm:$0xff] %vm78, %v2991
  // Predicated region
  $region38: #{apply.1} parent=0 // pred_check
    _
  $region39: #{apply.1} parent=0 // pred_check_branch
    %2999 = sbr.rel (0) target = $region41
  $region40: #{apply.1} parent=0 // pred_region
    _
  $region41: #{apply.1} parent=0 // pred_fallthru
    _
  // Predicated region
  $region42: #{apply.1} parent=0 // pred_check
    _
  $region43: #{apply.1} parent=0 // pred_check_branch
    %3001 = sbr.rel (0) target = $region45
  $region44: #{apply.1} parent=0 // pred_region
    _
  $region45: #{apply.1} parent=0 // pred_fallthru
    _

</llo_original>
